<compile_context>
chip_gen: v7x
topology: tpu7x:2x2x1
jax: 0.10.0
libtpu: 0.0.40
codegen_flags: <defaults>
</compile_context>

<pallas_src>
import jax
import jax.numpy as jnp
from jax.experimental import pallas as pl
from jax.experimental.pallas import tpu as pltpu


def _round_up(x, m):
    return ((x + m - 1) // m) * m


# ----------------------------- Pallas kernel --------------------------------
def neumf_kernel(u_ref, i_ref, w1a_ref, w1b_ref, b1_ref, w2_ref, b2_ref,
                 w3_ref, b3_ref, wlm_ref, wlg_ref, bl_ref, out_ref):
    # u_ref / i_ref: [TB, 2D] bf16 — cols [:D] = MLP embedding, [D:] = MF.
    D = u_ref.shape[1] // 2
    f32 = jnp.float32

    # --- GMF branch: elementwise product on the VPU, in f32 -----------------
    u_mf = u_ref[:, D:2 * D].astype(f32)                 # [TB, D]
    i_mf = i_ref[:, D:2 * D].astype(f32)
    gmf = u_mf * i_mf                                    # [TB, D] f32

    # --- MLP branch: cat(u_mlp, i_mlp) @ W1^T == split dots (concat-free) ---
    h = (jnp.dot(u_ref[:, 0:D], w1a_ref[...], preferred_element_type=f32)
         + jnp.dot(i_ref[:, 0:D], w1b_ref[...], preferred_element_type=f32)
         + b1_ref[...])
    h = jnp.maximum(h, 0.0)                              # [TB, 32] f32

    h = jnp.dot(h, w2_ref[...].astype(f32),
                preferred_element_type=f32) + b2_ref[...]
    h = jnp.maximum(h, 0.0)                              # [TB, 16] f32

    h = jnp.dot(h, w3_ref[...].astype(f32),
                preferred_element_type=f32) + b3_ref[...]
    h = jnp.maximum(h, 0.0)                              # [TB, 8] f32

    # --- NeuMF head: concat(mlp, gmf) @ W_last == split dots ----------------
    logits = (jnp.dot(h, wlm_ref[...].astype(f32), preferred_element_type=f32)
              + jnp.dot(gmf, wlg_ref[...].astype(f32), preferred_element_type=f32)
              + bl_ref[...])                             # [TB, 1] f32
    out_ref[...] = logits


# ------------------------------- wrapper -------------------------------------
def neumf_forward(interaction_pairs, params, tb=4096):
    """interaction_pairs: int32 [B, 2] of (user_id, global_item_id)."""
    num_users = params["num_users"]
    twoD = params["emb_user"].shape[1]
    B = interaction_pairs.shape[0]

    # Batch tile: multiple of 128 (sublane-friendly), capped at `tb`.
    TB = min(tb, _round_up(B, 128))
    B_pad = _round_up(B, TB)
    pad = B_pad - B

    user_idx = jnp.pad(interaction_pairs[:, 0], (0, pad))
    item_idx = jnp.pad(interaction_pairs[:, 1] - num_users, (0, pad))

    # Embedding gathers (indexing glue, plain JAX). One packed row per entity.
    u_emb = jnp.take(params["emb_user"], user_idx, axis=0)   # [B_pad, 2D] bf16
    i_emb = jnp.take(params["emb_item"], item_idx, axis=0)   # [B_pad, 2D] bf16

    weights = (params["w1a"], params["w1b"], params["b1"],
               params["w2"], params["b2"],
               params["w3"], params["b3"],
               params["wlm"], params["wlg"], params["bl"])

    def resident(x):
        # Constant block index -> stays resident in VMEM, no re-DMA per step.
        return pl.BlockSpec(x.shape, lambda b: (0, 0))

    out = pl.pallas_call(
        neumf_kernel,
        out_shape=jax.ShapeDtypeStruct((B_pad, 1), jnp.float32),
        grid=(B_pad // TB,),
        in_specs=[pl.BlockSpec((TB, twoD), lambda b: (b, 0)),
                  pl.BlockSpec((TB, twoD), lambda b: (b, 0))]
                 + [resident(x) for x in weights],
        out_specs=pl.BlockSpec((TB, 1), lambda b: (b, 0)),
        compiler_params=pltpu.CompilerParams(
            dimension_semantics=("parallel",),           # megacore sharding
            vmem_limit_bytes=32 * 1024 * 1024),          # safe on v5e/v6e/v7x
    )(u_emb, i_emb, *weights)

    return out[:B, 0]            # matches torch logits.squeeze()


# --------------------------- parameter init ----------------------------------
def init_params(key, num_users, num_items, embed_dim):
    ks = jax.random.split(key, 8)
    D = embed_dim
    bf16 = jnp.bfloat16

    def xavier(k, shape, fan_in, fan_out):
        bound = jnp.sqrt(6.0 / (fan_in + fan_out))
        return jax.random.uniform(k, shape, jnp.float32, -bound, bound)

    def emb(k, n):
        # nn.init.normal_(std=0.01); stored bf16 for HBM bandwidth.
        return (0.01 * jax.random.normal(k, (n, D), jnp.float32)).astype(bf16)

    # Packed per-entity tables: cols [:D] = MLP embedding, [D:] = MF embedding.
    emb_user = jnp.concatenate([emb(ks[0], num_users), emb(ks[2], num_users)], axis=1)
    emb_item = jnp.concatenate([emb(ks[1], num_items), emb(ks[3], num_items)], axis=1)

    # torch Linear weights are [out, in]; the kernel uses x @ W^T, so store
    # the [in, out] transposes (and split W1 / W_last along the concat axis).
    w1 = xavier(ks[4], (32, 2 * D), 2 * D, 32)
    w2 = xavier(ks[5], (16, 32), 32, 16)
    w3 = xavier(ks[6], (8, 16), 16, 8)
    wl = xavier(ks[7], (1, 8 + D), 8 + D, 1)

    params = {
        "num_users": num_users,
        "emb_user": emb_user,                       # [num_users, 2D] bf16
        "emb_item": emb_item,                       # [num_items, 2D] bf16
        "w1a": w1[:, :D].T.astype(bf16),            # [D, 32]  (user-mlp half)
        "w1b": w1[:, D:].T.astype(bf16),            # [D, 32]  (item-mlp half)
        "b1": jnp.zeros((1, 32), jnp.float32),
        "w2": w2.T.astype(bf16),                    # [32, 16]
        "b2": jnp.zeros((1, 16), jnp.float32),
        "w3": w3.T.astype(bf16),                    # [16, 8]
        "b3": jnp.zeros((1, 8), jnp.float32),
        "wlm": wl[:, :8].T.astype(bf16),            # [8, 1]   (MLP half of head)
        "wlg": wl[:, 8:].T.astype(bf16),            # [D, 1]   (GMF half of head)
        "bl": jnp.zeros((1, 1), jnp.float32),
    }
    return params


# ------------------------------ reference ------------------------------------
def neumf_reference(interaction_pairs, params):
    f32 = jnp.float32
    num_users = params["num_users"]
    D = params["wlg"].shape[0]
    u = interaction_pairs[:, 0]
    it = interaction_pairs[:, 1] - num_users
    ue = params["emb_user"][u].astype(f32)          # [B, 2D]
    ie = params["emb_item"][it].astype(f32)
    gmf = ue[:, D:] * ie[:, D:]
    h = jnp.maximum(ue[:, :D] @ params["w1a"].astype(f32)
                    + ie[:, :D] @ params["w1b"].astype(f32)
                    + params["b1"], 0.0)
    h = jnp.maximum(h @ params["w2"].astype(f32) + params["b2"], 0.0)
    h = jnp.maximum(h @ params["w3"].astype(f32) + params["b3"], 0.0)
    logits = (h @ params["wlm"].astype(f32)
              + gmf @ params["wlg"].astype(f32)
              + params["bl"])
    return logits[:, 0]


if __name__ == "__main__":
    key = jax.random.PRNGKey(0)
    num_users, num_items, embed_dim = 10, 12, 16
    batch = 8

    pk, uk, ik = jax.random.split(key, 3)
    params = init_params(pk, num_users, num_items, embed_dim)

    user_ids = jax.random.randint(uk, (batch,), 0, num_users, dtype=jnp.int32)
    # global item ids live in [num_users, num_users + num_items)
    item_ids = jax.random.randint(
        ik, (batch,), num_users, num_users + num_items, dtype=jnp.int32)
    interaction_pairs = jnp.stack([user_ids, item_ids], axis=1)   # [B, 2] int32

    out = jax.block_until_ready(neumf_forward(interaction_pairs, params))
    ref = neumf_reference(interaction_pairs, params)

    assert out.shape == (batch,)
    assert jnp.allclose(out, ref, atol=1e-4, rtol=1e-4), (out, ref)

    print("KERNEL_OK")
</pallas_src>

<mosaic_0001>
module attributes {stable_mosaic.version = 11 : i64} {
  func.func @neumf_kernel(%arg0: i32, %arg1: memref<128x32xbf16, #tpu.memory_space<vmem>>, %arg2: memref<128x32xbf16, #tpu.memory_space<vmem>>, %arg3: memref<16x32xbf16, #tpu.memory_space<vmem>>, %arg4: memref<16x32xbf16, #tpu.memory_space<vmem>>, %arg5: memref<1x32xf32, #tpu.memory_space<vmem>>, %arg6: memref<32x16xbf16, #tpu.memory_space<vmem>>, %arg7: memref<1x16xf32, #tpu.memory_space<vmem>>, %arg8: memref<16x8xbf16, #tpu.memory_space<vmem>>, %arg9: memref<1x8xf32, #tpu.memory_space<vmem>>, %arg10: memref<8x1xbf16, #tpu.memory_space<vmem>>, %arg11: memref<16x1xbf16, #tpu.memory_space<vmem>>, %arg12: memref<1x1xf32, #tpu.memory_space<vmem>>, %arg13: memref<128x1xf32, #tpu.memory_space<vmem>>) attributes {dimension_semantics = [#tpu.dimension_semantics<parallel>], iteration_bounds = array<i64: 1>, scalar_prefetch = 0 : i64, scratch_operands = 0 : i64, tpu.core_type = #tpu.core_type<tc>, window_params = [{transform_indices = @transform_0, window_bounds = array<i64: 128, 32>}, {transform_indices = @transform_1, window_bounds = array<i64: 128, 32>}, {pipeline_mode = #tpu.pipeline_mode<synchronous>, transform_indices = @transform_2, window_bounds = array<i64: 16, 32>}, {pipeline_mode = #tpu.pipeline_mode<synchronous>, transform_indices = @transform_3, window_bounds = array<i64: 16, 32>}, {pipeline_mode = #tpu.pipeline_mode<synchronous>, transform_indices = @transform_4, window_bounds = array<i64: 1, 32>}, {pipeline_mode = #tpu.pipeline_mode<synchronous>, transform_indices = @transform_5, window_bounds = array<i64: 32, 16>}, {pipeline_mode = #tpu.pipeline_mode<synchronous>, transform_indices = @transform_6, window_bounds = array<i64: 1, 16>}, {pipeline_mode = #tpu.pipeline_mode<synchronous>, transform_indices = @transform_7, window_bounds = array<i64: 16, 8>}, {pipeline_mode = #tpu.pipeline_mode<synchronous>, transform_indices = @transform_8, window_bounds = array<i64: 1, 8>}, {pipeline_mode = #tpu.pipeline_mode<synchronous>, transform_indices = @transform_9, window_bounds = array<i64: 8, 1>}, {pipeline_mode = #tpu.pipeline_mode<synchronous>, transform_indices = @transform_10, window_bounds = array<i64: 16, 1>}, {pipeline_mode = #tpu.pipeline_mode<synchronous>, transform_indices = @transform_11, window_bounds = array<i64: 1, 1>}, {transform_indices = @transform_12, window_bounds = array<i64: 128, 1>}]} {
    %c0 = arith.constant 0 : index
    %c16 = arith.constant 16 : index
    %0 = vector.load %arg1[%c0, %c16] : memref<128x32xbf16, #tpu.memory_space<vmem>>, vector<128x16xbf16>
    %1 = arith.extf %0 : vector<128x16xbf16> to vector<128x16xf32>
    %c0_0 = arith.constant 0 : index
    %c16_1 = arith.constant 16 : index
    %2 = vector.load %arg2[%c0_0, %c16_1] : memref<128x32xbf16, #tpu.memory_space<vmem>>, vector<128x16xbf16>
    %3 = arith.extf %2 : vector<128x16xbf16> to vector<128x16xf32>
    %4 = arith.mulf %1, %3 : vector<128x16xf32>
    %c0_2 = arith.constant 0 : index
    %c0_3 = arith.constant 0 : index
    %5 = vector.load %arg1[%c0_2, %c0_3] : memref<128x32xbf16, #tpu.memory_space<vmem>>, vector<128x16xbf16>
    %c0_4 = arith.constant 0 : index
    %c0_5 = arith.constant 0 : index
    %6 = vector.load %arg3[%c0_4, %c0_5] : memref<16x32xbf16, #tpu.memory_space<vmem>>, vector<16x32xbf16>
    %cst = arith.constant dense<0.000000e+00> : vector<128x32xf32>
    %7 = tpu.matmul %5, %6, %cst {dimension_numbers = #tpu.dot_dimension_numbers<[1], [0], [0], [1], [0, 0, 1, 1], [], []>} : vector<128x16xbf16>, vector<16x32xbf16>, vector<128x32xf32> -> vector<128x32xf32>
    %c0_6 = arith.constant 0 : index
    %c0_7 = arith.constant 0 : index
    %8 = vector.load %arg2[%c0_6, %c0_7] : memref<128x32xbf16, #tpu.memory_space<vmem>>, vector<128x16xbf16>
    %c0_8 = arith.constant 0 : index
    %c0_9 = arith.constant 0 : index
    %9 = vector.load %arg4[%c0_8, %c0_9] : memref<16x32xbf16, #tpu.memory_space<vmem>>, vector<16x32xbf16>
    %cst_10 = arith.constant dense<0.000000e+00> : vector<128x32xf32>
    %10 = tpu.matmul %8, %9, %cst_10 {dimension_numbers = #tpu.dot_dimension_numbers<[1], [0], [0], [1], [0, 0, 1, 1], [], []>} : vector<128x16xbf16>, vector<16x32xbf16>, vector<128x32xf32> -> vector<128x32xf32>
    %11 = arith.addf %7, %10 : vector<128x32xf32>
    %c0_11 = arith.constant 0 : index
    %c0_12 = arith.constant 0 : index
    %12 = vector.load %arg5[%c0_11, %c0_12] : memref<1x32xf32, #tpu.memory_space<vmem>>, vector<1x32xf32>
    %13 = vector.broadcast %12 : vector<1x32xf32> to vector<128x32xf32>
    %14 = arith.addf %11, %13 : vector<128x32xf32>
    %cst_13 = arith.constant 0.000000e+00 : f32
    %15 = vector.broadcast %cst_13 : f32 to vector<128x32xf32>
    %16 = arith.maximumf %14, %15 : vector<128x32xf32>
    %c0_14 = arith.constant 0 : index
    %c0_15 = arith.constant 0 : index
    %17 = vector.load %arg6[%c0_14, %c0_15] : memref<32x16xbf16, #tpu.memory_space<vmem>>, vector<32x16xbf16>
    %18 = arith.extf %17 : vector<32x16xbf16> to vector<32x16xf32>
    %cst_16 = arith.constant dense<0.000000e+00> : vector<128x16xf32>
    %19 = tpu.matmul %16, %18, %cst_16 {dimension_numbers = #tpu.dot_dimension_numbers<[1], [0], [0], [1], [0, 0, 1, 1], [], []>} : vector<128x32xf32>, vector<32x16xf32>, vector<128x16xf32> -> vector<128x16xf32>
    %c0_17 = arith.constant 0 : index
    %c0_18 = arith.constant 0 : index
    %20 = vector.load %arg7[%c0_17, %c0_18] : memref<1x16xf32, #tpu.memory_space<vmem>>, vector<1x16xf32>
    %21 = vector.broadcast %20 : vector<1x16xf32> to vector<128x16xf32>
    %22 = arith.addf %19, %21 : vector<128x16xf32>
    %cst_19 = arith.constant 0.000000e+00 : f32
    %23 = vector.broadcast %cst_19 : f32 to vector<128x16xf32>
    %24 = arith.maximumf %22, %23 : vector<128x16xf32>
    %c0_20 = arith.constant 0 : index
    %c0_21 = arith.constant 0 : index
    %25 = vector.load %arg8[%c0_20, %c0_21] : memref<16x8xbf16, #tpu.memory_space<vmem>>, vector<16x8xbf16>
    %26 = arith.extf %25 : vector<16x8xbf16> to vector<16x8xf32>
    %cst_22 = arith.constant dense<0.000000e+00> : vector<128x8xf32>
    %27 = tpu.matmul %24, %26, %cst_22 {dimension_numbers = #tpu.dot_dimension_numbers<[1], [0], [0], [1], [0, 0, 1, 1], [], []>} : vector<128x16xf32>, vector<16x8xf32>, vector<128x8xf32> -> vector<128x8xf32>
    %c0_23 = arith.constant 0 : index
    %c0_24 = arith.constant 0 : index
    %28 = vector.load %arg9[%c0_23, %c0_24] : memref<1x8xf32, #tpu.memory_space<vmem>>, vector<1x8xf32>
    %29 = vector.broadcast %28 : vector<1x8xf32> to vector<128x8xf32>
    %30 = arith.addf %27, %29 : vector<128x8xf32>
    %cst_25 = arith.constant 0.000000e+00 : f32
    %31 = vector.broadcast %cst_25 : f32 to vector<128x8xf32>
    %32 = arith.maximumf %30, %31 : vector<128x8xf32>
    %c0_26 = arith.constant 0 : index
    %c0_27 = arith.constant 0 : index
    %33 = vector.load %arg10[%c0_26, %c0_27] : memref<8x1xbf16, #tpu.memory_space<vmem>>, vector<8x1xbf16>
    %34 = arith.extf %33 : vector<8x1xbf16> to vector<8x1xf32>
    %cst_28 = arith.constant dense<0.000000e+00> : vector<128x1xf32>
    %35 = tpu.matmul %32, %34, %cst_28 {dimension_numbers = #tpu.dot_dimension_numbers<[1], [0], [0], [1], [0, 0, 1, 1], [], []>} : vector<128x8xf32>, vector<8x1xf32>, vector<128x1xf32> -> vector<128x1xf32>
    %c0_29 = arith.constant 0 : index
    %c0_30 = arith.constant 0 : index
    %36 = vector.load %arg11[%c0_29, %c0_30] : memref<16x1xbf16, #tpu.memory_space<vmem>>, vector<16x1xbf16>
    %37 = arith.extf %36 : vector<16x1xbf16> to vector<16x1xf32>
    %cst_31 = arith.constant dense<0.000000e+00> : vector<128x1xf32>
    %38 = tpu.matmul %4, %37, %cst_31 {dimension_numbers = #tpu.dot_dimension_numbers<[1], [0], [0], [1], [0, 0, 1, 1], [], []>} : vector<128x16xf32>, vector<16x1xf32>, vector<128x1xf32> -> vector<128x1xf32>
    %39 = arith.addf %35, %38 : vector<128x1xf32>
    %c0_32 = arith.constant 0 : index
    %c0_33 = arith.constant 0 : index
    %40 = vector.load %arg12[%c0_32, %c0_33] : memref<1x1xf32, #tpu.memory_space<vmem>>, vector<1x1xf32>
    %41 = vector.broadcast %40 : vector<1x1xf32> to vector<128x1xf32>
    %42 = arith.addf %39, %41 : vector<128x1xf32>
    %c0_34 = arith.constant 0 : index
    %c0_35 = arith.constant 0 : index
    %43 = vector.load %arg13[%c0_34, %c0_35] : memref<128x1xf32, #tpu.memory_space<vmem>>, vector<128x1xf32>
    tpu.vector_store %arg13[%c0_34, %c0_35], %42 {strides = array<i32>} : memref<128x1xf32, #tpu.memory_space<vmem>>, vector<128x1xf32>,
    return
  }
  func.func @transform_0(%arg0: i32) -> (i32, i32) {
    %c0_i32 = arith.constant 0 : i32
    %c0_i32_0 = arith.constant 0 : i32
    return %arg0, %c0_i32 : i32, i32
  }
  func.func @transform_1(%arg0: i32) -> (i32, i32) {
    %c0_i32 = arith.constant 0 : i32
    %c0_i32_0 = arith.constant 0 : i32
    return %arg0, %c0_i32 : i32, i32
  }
  func.func @transform_2(%arg0: i32) -> (i32, i32) {
    %c0_i32 = arith.constant 0 : i32
    %c0_i32_0 = arith.constant 0 : i32
    %c0_i32_1 = arith.constant 0 : i32
    return %c0_i32, %c0_i32_0 : i32, i32
  }
  func.func @transform_3(%arg0: i32) -> (i32, i32) {
    %c0_i32 = arith.constant 0 : i32
    %c0_i32_0 = arith.constant 0 : i32
    %c0_i32_1 = arith.constant 0 : i32
    return %c0_i32, %c0_i32_0 : i32, i32
  }
  func.func @transform_4(%arg0: i32) -> (i32, i32) {
    %c0_i32 = arith.constant 0 : i32
    %c0_i32_0 = arith.constant 0 : i32
    %c0_i32_1 = arith.constant 0 : i32
    return %c0_i32, %c0_i32_0 : i32, i32
  }
  func.func @transform_5(%arg0: i32) -> (i32, i32) {
    %c0_i32 = arith.constant 0 : i32
    %c0_i32_0 = arith.constant 0 : i32
    %c0_i32_1 = arith.constant 0 : i32
    return %c0_i32, %c0_i32_0 : i32, i32
  }
  func.func @transform_6(%arg0: i32) -> (i32, i32) {
    %c0_i32 = arith.constant 0 : i32
    %c0_i32_0 = arith.constant 0 : i32
    %c0_i32_1 = arith.constant 0 : i32
    return %c0_i32, %c0_i32_0 : i32, i32
  }
  func.func @transform_7(%arg0: i32) -> (i32, i32) {
    %c0_i32 = arith.constant 0 : i32
    %c0_i32_0 = arith.constant 0 : i32
    %c0_i32_1 = arith.constant 0 : i32
    return %c0_i32, %c0_i32_0 : i32, i32
  }
  func.func @transform_8(%arg0: i32) -> (i32, i32) {
    %c0_i32 = arith.constant 0 : i32
    %c0_i32_0 = arith.constant 0 : i32
    %c0_i32_1 = arith.constant 0 : i32
    return %c0_i32, %c0_i32_0 : i32, i32
  }
  func.func @transform_9(%arg0: i32) -> (i32, i32) {
    %c0_i32 = arith.constant 0 : i32
    %c0_i32_0 = arith.constant 0 : i32
    %c0_i32_1 = arith.constant 0 : i32
    return %c0_i32, %c0_i32_0 : i32, i32
  }
  func.func @transform_10(%arg0: i32) -> (i32, i32) {
    %c0_i32 = arith.constant 0 : i32
    %c0_i32_0 = arith.constant 0 : i32
    %c0_i32_1 = arith.constant 0 : i32
    return %c0_i32, %c0_i32_0 : i32, i32
  }
  func.func @transform_11(%arg0: i32) -> (i32, i32) {
    %c0_i32 = arith.constant 0 : i32
    %c0_i32_0 = arith.constant 0 : i32
    %c0_i32_1 = arith.constant 0 : i32
    return %c0_i32, %c0_i32_0 : i32, i32
  }
  func.func @transform_12(%arg0: i32) -> (i32, i32) {
    %c0_i32 = arith.constant 0 : i32
    %c0_i32_0 = arith.constant 0 : i32
    return %arg0, %c0_i32 : i32, i32
  }
}

</mosaic_0001>

<llo_original>
// kernel: tpu_custom_call.1
$region0: #{tpu_custom_call.1}
  #allocation0 [shape = 'u32[]', space=smem, size = 0x4, offset = 0x4, fixed_abs, tag = 'smem constant byte address 0x4 - core index']
  #allocation1 [shape = 'u32[144,128]{1,0:T(1,128)}', space=vmem, size = 0x12000, scoped, tag = 'internal scratch']
  #allocation2 [shape = 'f32[1,1]{1,0:T(1,128)S(1)}', space=vmem, size = 0x200, scoped, tag = 'scoped memory for tpu_custom_call.1']
  %s0 = inlined_call_operand.vmem [shape: bf16[128,32], index: 0, kind: input, shape index: {}]
  %s1 = inlined_call_operand.vmem [shape: bf16[128,32], index: 1, kind: input, shape index: {}]
  %s2 = inlined_call_operand.vmem [shape: bf16[16,32], index: 2, kind: input, shape index: {}]
  %s3 = inlined_call_operand.vmem [shape: bf16[16,32], index: 3, kind: input, shape index: {}]
  %s4 = inlined_call_operand.vmem [shape: f32[1,32], index: 4, kind: input, shape index: {}]
  %s5 = inlined_call_operand.vmem [shape: bf16[32,16], index: 5, kind: input, shape index: {}]
  %s6 = inlined_call_operand.vmem [shape: f32[1,16], index: 6, kind: input, shape index: {}]
  %s7 = inlined_call_operand.vmem [shape: bf16[16,8], index: 7, kind: input, shape index: {}]
  %s8 = inlined_call_operand.vmem [shape: f32[1,8], index: 8, kind: input, shape index: {}]
  %s9 = inlined_call_operand.vmem [shape: bf16[8,1], index: 9, kind: input, shape index: {}]
  %s10 = inlined_call_operand.vmem [shape: bf16[16,1], index: 10, kind: input, shape index: {}]
  %s11 = inlined_call_operand.<no memory space> [shape: f32[1,1], index: 11, kind: input, shape index: {}]
  %s12 = inlined_call_operand.vmem [shape: f32[128,1], index: 12, kind: output, shape index: {}]
  %s13 = sld [smem:[#allocation0]]
  $region58: #{tpu_custom_call.1} parent=0
    _
  %s15 = ssub.s32 1, %s13
  %s16 = scalar_select 0, %s15, %s13
  %v17 = vstv %s11
  %18 = vst [vmem:[#allocation2] sm:$0x1] %v17
  // Predicated region
  $region2: #{tpu_custom_call.1} parent=0 // pred_check
    _
  $region3: #{tpu_custom_call.1} parent=0 // pred_check_branch
    %20 = sbr.rel (0) target = $region5
  $region4: #{tpu_custom_call.1} parent=0 // pred_region
    _
  $region5: #{tpu_custom_call.1} parent=0 // pred_fallthru
    _
  // Predicated region
  $region6: #{tpu_custom_call.1} parent=0 // pred_check
    _
  $region7: #{tpu_custom_call.1} parent=0 // pred_check_branch
    %22 = sbr.rel (0) target = $region9
  $region8: #{tpu_custom_call.1} parent=0 // pred_region
    _
  $region9: #{tpu_custom_call.1} parent=0 // pred_fallthru
    _
  // Predicated region
  $region10: #{tpu_custom_call.1} parent=0 // pred_check
    _
  $region11: #{tpu_custom_call.1} parent=0 // pred_check_branch
    %24 = sbr.rel (0) target = $region13
  $region12: #{tpu_custom_call.1} parent=0 // pred_region
    _
  $region13: #{tpu_custom_call.1} parent=0 // pred_fallthru
    _
  // Predicated region
  $region14: #{tpu_custom_call.1} parent=0 // pred_check
    _
  $region15: #{tpu_custom_call.1} parent=0 // pred_check_branch
    %26 = sbr.rel (0) target = $region17
  $region16: #{tpu_custom_call.1} parent=0 // pred_region
    _
  $region17: #{tpu_custom_call.1} parent=0 // pred_fallthru
    _
  // Predicated region
  $region18: #{tpu_custom_call.1} parent=0 // pred_check
    _
  $region19: #{tpu_custom_call.1} parent=0 // pred_check_branch
    %28 = sbr.rel (0) target = $region21
  $region20: #{tpu_custom_call.1} parent=0 // pred_region
    _
  $region21: #{tpu_custom_call.1} parent=0 // pred_fallthru
    _
  // Predicated region
  $region22: #{tpu_custom_call.1} parent=0 // pred_check
    _
  $region23: #{tpu_custom_call.1} parent=0 // pred_check_branch
    %30 = sbr.rel (0) target = $region25
  $region24: #{tpu_custom_call.1} parent=0 // pred_region
    _
  $region25: #{tpu_custom_call.1} parent=0 // pred_fallthru
    _
  // Predicated region
  $region26: #{tpu_custom_call.1} parent=0 // pred_check
    _
  $region27: #{tpu_custom_call.1} parent=0 // pred_check_branch
    %32 = sbr.rel (0) target = $region29
  $region28: #{tpu_custom_call.1} parent=0 // pred_region
    _
  $region29: #{tpu_custom_call.1} parent=0 // pred_fallthru
    _
  // Predicated region
  $region30: #{tpu_custom_call.1} parent=0 // pred_check
    _
  $region31: #{tpu_custom_call.1} parent=0 // pred_check_branch
    %34 = sbr.rel (0) target = $region33
  $region32: #{tpu_custom_call.1} parent=0 // pred_region
    _
  $region33: #{tpu_custom_call.1} parent=0 // pred_fallthru
    _
  // Predicated region
  $region34: #{tpu_custom_call.1} parent=0 // pred_check
    _
  $region35: #{tpu_custom_call.1} parent=0 // pred_check_branch
    %36 = sbr.rel (0) target = $region37
  $region36: #{tpu_custom_call.1} parent=0 // pred_region
    _
  $region37: #{tpu_custom_call.1} parent=0 // pred_fallthru
    _
  // Predicated region
  $region38: #{tpu_custom_call.1} parent=0 // pred_check
    _
  $region39: #{tpu_custom_call.1} parent=0 // pred_check_branch
    %38 = sbr.rel (0) target = $region41
  $region40: #{tpu_custom_call.1} parent=0 // pred_region
    _
  $region41: #{tpu_custom_call.1} parent=0 // pred_fallthru
    _
  // Predicated region
  $region42: #{tpu_custom_call.1} parent=0 // pred_check
    _
  $region43: #{tpu_custom_call.1} parent=0 // pred_check_branch
    %40 = sbr.rel (0) target = $region45
  $region44: #{tpu_custom_call.1} parent=0 // pred_region
    _
  $region45: #{tpu_custom_call.1} parent=0 // pred_fallthru
    _
  // Predicated region
  $region46: #{tpu_custom_call.1} parent=0 // pred_check
    _
  $region47: #{tpu_custom_call.1} parent=0 // pred_check_branch
    %42 = sbr.rel (0) target = $region49
  $region48: #{tpu_custom_call.1} parent=0 // pred_region
    _
  $region49: #{tpu_custom_call.1} parent=0 // pred_fallthru
    _
  %v44 = vld [vmem:[%s0] sm:$0xf]
  %v45 = vld [vmem:[%s0 + $0x4] sm:$0xf]
  %v46 = vld [vmem:[%s0 + $0x8] sm:$0xf]
  %v47 = vld [vmem:[%s0 + $0xc] sm:$0xf]
  %v48 = vld [vmem:[%s0 + $0x10] sm:$0xf]
  %v49 = vld [vmem:[%s0 + $0x14] sm:$0xf]
  %v50 = vld [vmem:[%s0 + $0x18] sm:$0xf]
  %v51 = vld [vmem:[%s0 + $0x1c] sm:$0xf]
  %v52 = vld [vmem:[%s0 + $0x20] sm:$0xf]
  %v53 = vld [vmem:[%s0 + $0x24] sm:$0xf]
  %v54 = vld [vmem:[%s0 + $0x28] sm:$0xf]
  %v55 = vld [vmem:[%s0 + $0x2c] sm:$0xf]
  %v56 = vld [vmem:[%s0 + $0x30] sm:$0xf]
  %v57 = vld [vmem:[%s0 + $0x34] sm:$0xf]
  %v58 = vld [vmem:[%s0 + $0x38] sm:$0xf]
  %v59 = vld [vmem:[%s0 + $0x3c] sm:$0xf]
  %v60 = vunpack.c.l.bf16 %v44
  %v61 = vunpack.c.l.bf16 %v45
  %v62 = vunpack.c.l.bf16 %v46
  %v63 = vunpack.c.l.bf16 %v47
  %v64 = vunpack.c.l.bf16 %v48
  %v65 = vunpack.c.l.bf16 %v49
  %v66 = vunpack.c.l.bf16 %v50
  %v67 = vunpack.c.l.bf16 %v51
  %v68 = vunpack.c.l.bf16 %v52
  %v69 = vunpack.c.l.bf16 %v53
  %v70 = vunpack.c.l.bf16 %v54
  %v71 = vunpack.c.l.bf16 %v55
  %v72 = vunpack.c.l.bf16 %v56
  %v73 = vunpack.c.l.bf16 %v57
  %v74 = vunpack.c.l.bf16 %v58
  %v75 = vunpack.c.l.bf16 %v59
  %v76 = vld [vmem:[%s1] sm:$0xf]
  %v77 = vld [vmem:[%s1 + $0x4] sm:$0xf]
  %v78 = vld [vmem:[%s1 + $0x8] sm:$0xf]
  %v79 = vld [vmem:[%s1 + $0xc] sm:$0xf]
  %v80 = vld [vmem:[%s1 + $0x10] sm:$0xf]
  %v81 = vld [vmem:[%s1 + $0x14] sm:$0xf]
  %v82 = vld [vmem:[%s1 + $0x18] sm:$0xf]
  %v83 = vld [vmem:[%s1 + $0x1c] sm:$0xf]
  %v84 = vld [vmem:[%s1 + $0x20] sm:$0xf]
  %v85 = vld [vmem:[%s1 + $0x24] sm:$0xf]
  %v86 = vld [vmem:[%s1 + $0x28] sm:$0xf]
  %v87 = vld [vmem:[%s1 + $0x2c] sm:$0xf]
  %v88 = vld [vmem:[%s1 + $0x30] sm:$0xf]
  %v89 = vld [vmem:[%s1 + $0x34] sm:$0xf]
  %v90 = vld [vmem:[%s1 + $0x38] sm:$0xf]
  %v91 = vld [vmem:[%s1 + $0x3c] sm:$0xf]
  %v92 = vunpack.c.l.bf16 %v76
  %v93 = vunpack.c.l.bf16 %v77
  %v94 = vunpack.c.l.bf16 %v78
  %v95 = vunpack.c.l.bf16 %v79
  %v96 = vunpack.c.l.bf16 %v80
  %v97 = vunpack.c.l.bf16 %v81
  %v98 = vunpack.c.l.bf16 %v82
  %v99 = vunpack.c.l.bf16 %v83
  %v100 = vunpack.c.l.bf16 %v84
  %v101 = vunpack.c.l.bf16 %v85
  %v102 = vunpack.c.l.bf16 %v86
  %v103 = vunpack.c.l.bf16 %v87
  %v104 = vunpack.c.l.bf16 %v88
  %v105 = vunpack.c.l.bf16 %v89
  %v106 = vunpack.c.l.bf16 %v90
  %v107 = vunpack.c.l.bf16 %v91
  %v108 = vmul.f32 %v60, %v92
  %v109 = vmul.f32 %v61, %v93
  %v110 = vmul.f32 %v62, %v94
  %v111 = vmul.f32 %v63, %v95
  %v112 = vmul.f32 %v64, %v96
  %v113 = vmul.f32 %v65, %v97
  %v114 = vmul.f32 %v66, %v98
  %v115 = vmul.f32 %v67, %v99
  %v116 = vmul.f32 %v68, %v100
  %v117 = vmul.f32 %v69, %v101
  %v118 = vmul.f32 %v70, %v102
  %v119 = vmul.f32 %v71, %v103
  %v120 = vmul.f32 %v72, %v104
  %v121 = vmul.f32 %v73, %v105
  %v122 = vmul.f32 %v74, %v106
  %v123 = vmul.f32 %v75, %v107
  %v124 = vld [vmem:[%s2] sm:$0xf]
  %v125 = vld [vmem:[%s2 + $0x4] sm:$0xf]
  %v126 = vld [vmem:[%s3] sm:$0xf]
  %v127 = vld [vmem:[%s3 + $0x4] sm:$0xf]
  %v144 = vunpack.c.l.b16 %v76
  %v145 = vunpack.c.l.b16 %v77
  %v146 = vunpack.c.l.b16 %v78
  %v147 = vunpack.c.l.b16 %v79
  %v148 = vunpack.c.l.b16 %v80
  %v149 = vunpack.c.l.b16 %v81
  %v150 = vunpack.c.l.b16 %v82
  %v151 = vunpack.c.l.b16 %v83
  %v152 = vunpack.c.l.b16 %v84
  %v153 = vunpack.c.l.b16 %v85
  %v154 = vunpack.c.l.b16 %v86
  %v155 = vunpack.c.l.b16 %v87
  %v156 = vunpack.c.l.b16 %v88
  %v157 = vunpack.c.l.b16 %v89
  %v158 = vunpack.c.l.b16 %v90
  %v159 = vunpack.c.l.b16 %v91
  %v160 = vpack.c.b16 %v145, %v144
  %v161 = vpack.c.b16 %v147, %v146
  %v162 = vpack.c.b16 %v149, %v148
  %v163 = vpack.c.b16 %v151, %v150
  %v164 = vpack.c.b16 %v153, %v152
  %v165 = vpack.c.b16 %v155, %v154
  %v166 = vpack.c.b16 %v157, %v156
  %v167 = vpack.c.b16 %v159, %v158
  %v170 = vunpack.c.l.b16 %v126
  %v171 = vunpack.c.l.b16 %v127
  %v172 = vpack.c.b16 %v171, %v170
  %vm174 = vcmask 130048
  %v176 = vsel %vm174, %v160, 0
  %v179 = vsel %vm174, %v161, 0
  %v182 = vsel %vm174, %v162, 0
  %v185 = vsel %vm174, %v163, 0
  %v188 = vsel %vm174, %v164, 0
  %v191 = vsel %vm174, %v165, 0
  %v194 = vsel %vm174, %v166, 0
  %v197 = vsel %vm174, %v167, 0
  %199 = vmatprep.subr.bf16.mxu0 0
  %200 = vmatpush1.bf16.msra.mxu0 %v172
  %201 = vmatprep.subr.bf16.mxu0 0
  %202 = vmatpush1.bf16.msra.mxu0 0
  %203 = vmatprep.subr.bf16.mxu0 0
  %204 = vmatpush1.bf16.msra.mxu0 0
  %205 = vmatprep.subr.bf16.mxu0 0
  %206 = vmatpush1.bf16.msra.mxu0 0
  %207 = vmatprep.subr.bf16.mxu0 0
  %208 = vmatpush1.bf16.msra.mxu0 0
  %209 = vmatprep.subr.bf16.mxu0 0
  %210 = vmatpush1.bf16.msra.mxu0 0
  %211 = vmatprep.subr.bf16.mxu0 0
  %212 = vmatpush1.bf16.msra.mxu0 0
  %213 = vmatprep.subr.bf16.mxu0 0
  %214 = vmatpush1.bf16.msra.mxu0 0
  %215 = vmatprep.subr.bf16.mxu0 0
  %216 = vmatpush1.bf16.msra.mxu0 0
  %217 = vmatprep.subr.bf16.mxu0 0
  %218 = vmatpush1.bf16.msra.mxu0 0
  %219 = vmatprep.subr.bf16.mxu0 0
  %220 = vmatpush1.bf16.msra.mxu0 0
  %221 = vmatprep.subr.bf16.mxu0 0
  %222 = vmatpush1.bf16.msra.mxu0 0
  %223 = vmatprep.subr.bf16.mxu0 0
  %224 = vmatpush1.bf16.msra.mxu0 0
  %225 = vmatprep.subr.bf16.mxu0 0
  %226 = vmatpush1.bf16.msra.mxu0 0
  %227 = vmatprep.subr.bf16.mxu0 0
  %228 = vmatpush1.bf16.msra.mxu0 0
  %229 = vmatprep.subr.bf16.mxu0 0
  %230 = vmatpush1.bf16.msra.mxu0 0
  %231 = vmatprep.mubr.bf16.mxu0 0
  %232 = vmatmul.mubr.bf16.gmra.mrb[0].mxu0 %v176
  %v233 = vpop.f32.mrb[0].mxu0
  %v234 = vadd.f32 0.0, %v233
  %v235 = vpop.f32.mrb[0].mxu0
  %v236 = vpop.f32.mrb[0].mxu0
  %v237 = vadd.f32 0.0, %v236
  %v238 = vpop.f32.mrb[0].mxu0
  %239 = vmatprep.mubr.bf16.mxu0 0
  %240 = vmatmul.mubr.bf16.gmra.mrb[0].mxu0 %v179
  %v241 = vpop.f32.mrb[0].mxu0
  %v242 = vadd.f32 0.0, %v241
  %v243 = vpop.f32.mrb[0].mxu0
  %v244 = vpop.f32.mrb[0].mxu0
  %v245 = vadd.f32 0.0, %v244
  %v246 = vpop.f32.mrb[0].mxu0
  %247 = vmatprep.mubr.bf16.mxu0 0
  %248 = vmatmul.mubr.bf16.gmra.mrb[0].mxu0 %v182
  %v249 = vpop.f32.mrb[0].mxu0
  %v250 = vadd.f32 0.0, %v249
  %v251 = vpop.f32.mrb[0].mxu0
  %v252 = vpop.f32.mrb[0].mxu0
  %v253 = vadd.f32 0.0, %v252
  %v254 = vpop.f32.mrb[0].mxu0
  %255 = vmatprep.mubr.bf16.mxu0 0
  %256 = vmatmul.mubr.bf16.gmra.mrb[0].mxu0 %v185
  %v257 = vpop.f32.mrb[0].mxu0
  %v258 = vadd.f32 0.0, %v257
  %v259 = vpop.f32.mrb[0].mxu0
  %v260 = vpop.f32.mrb[0].mxu0
  %v261 = vadd.f32 0.0, %v260
  %v262 = vpop.f32.mrb[0].mxu0
  %263 = vmatprep.mubr.bf16.mxu0 0
  %264 = vmatmul.mubr.bf16.gmra.mrb[0].mxu0 %v188
  %v265 = vpop.f32.mrb[0].mxu0
  %v266 = vadd.f32 0.0, %v265
  %v267 = vpop.f32.mrb[0].mxu0
  %v268 = vpop.f32.mrb[0].mxu0
  %v269 = vadd.f32 0.0, %v268
  %v270 = vpop.f32.mrb[0].mxu0
  %271 = vmatprep.mubr.bf16.mxu0 0
  %272 = vmatmul.mubr.bf16.gmra.mrb[0].mxu0 %v191
  %v273 = vpop.f32.mrb[0].mxu0
  %v274 = vadd.f32 0.0, %v273
  %v275 = vpop.f32.mrb[0].mxu0
  %v276 = vpop.f32.mrb[0].mxu0
  %v277 = vadd.f32 0.0, %v276
  %v278 = vpop.f32.mrb[0].mxu0
  %279 = vmatprep.mubr.bf16.mxu0 0
  %280 = vmatmul.mubr.bf16.gmra.mrb[0].mxu0 %v194
  %v281 = vpop.f32.mrb[0].mxu0
  %v282 = vadd.f32 0.0, %v281
  %v283 = vpop.f32.mrb[0].mxu0
  %v284 = vpop.f32.mrb[0].mxu0
  %v285 = vadd.f32 0.0, %v284
  %v286 = vpop.f32.mrb[0].mxu0
  %287 = vmatprep.mubr.bf16.mxu0 0
  %288 = vmatmul.mubr.bf16.gmra.mrb[0].mxu0 %v197
  %v289 = vpop.f32.mrb[0].mxu0
  %v290 = vadd.f32 0.0, %v289
  %v291 = vpop.f32.mrb[0].mxu0
  %v292 = vpop.f32.mrb[0].mxu0
  %v293 = vadd.f32 0.0, %v292
  %v294 = vpop.f32.mrb[0].mxu0
  %295 = vdwg.mxu0
  %v312 = vunpack.c.l.b16 %v44
  %v313 = vunpack.c.l.b16 %v45
  %v314 = vunpack.c.l.b16 %v46
  %v315 = vunpack.c.l.b16 %v47
  %v316 = vunpack.c.l.b16 %v48
  %v317 = vunpack.c.l.b16 %v49
  %v318 = vunpack.c.l.b16 %v50
  %v319 = vunpack.c.l.b16 %v51
  %v320 = vunpack.c.l.b16 %v52
  %v321 = vunpack.c.l.b16 %v53
  %v322 = vunpack.c.l.b16 %v54
  %v323 = vunpack.c.l.b16 %v55
  %v324 = vunpack.c.l.b16 %v56
  %v325 = vunpack.c.l.b16 %v57
  %v326 = vunpack.c.l.b16 %v58
  %v327 = vunpack.c.l.b16 %v59
  %v328 = vpack.c.b16 %v313, %v312
  %v329 = vpack.c.b16 %v315, %v314
  %v330 = vpack.c.b16 %v317, %v316
  %v331 = vpack.c.b16 %v319, %v318
  %v332 = vpack.c.b16 %v321, %v320
  %v333 = vpack.c.b16 %v323, %v322
  %v334 = vpack.c.b16 %v325, %v324
  %v335 = vpack.c.b16 %v327, %v326
  %v338 = vunpack.c.l.b16 %v124
  %v339 = vunpack.c.l.b16 %v125
  %v340 = vpack.c.b16 %v339, %v338
  %v343 = vsel %vm174, %v328, 0
  %v346 = vsel %vm174, %v329, 0
  %v349 = vsel %vm174, %v330, 0
  %v352 = vsel %vm174, %v331, 0
  %v355 = vsel %vm174, %v332, 0
  %v358 = vsel %vm174, %v333, 0
  %v361 = vsel %vm174, %v334, 0
  %v364 = vsel %vm174, %v335, 0
  %366 = vmatprep.subr.bf16.mxu0 0
  %367 = vmatpush1.bf16.msra.mxu0 %v340
  %368 = vmatprep.subr.bf16.mxu0 0
  %369 = vmatpush1.bf16.msra.mxu0 0
  %370 = vmatprep.subr.bf16.mxu0 0
  %371 = vmatpush1.bf16.msra.mxu0 0
  %372 = vmatprep.subr.bf16.mxu0 0
  %373 = vmatpush1.bf16.msra.mxu0 0
  %374 = vmatprep.subr.bf16.mxu0 0
  %375 = vmatpush1.bf16.msra.mxu0 0
  %376 = vmatprep.subr.bf16.mxu0 0
  %377 = vmatpush1.bf16.msra.mxu0 0
  %378 = vmatprep.subr.bf16.mxu0 0
  %379 = vmatpush1.bf16.msra.mxu0 0
  %380 = vmatprep.subr.bf16.mxu0 0
  %381 = vmatpush1.bf16.msra.mxu0 0
  %382 = vmatprep.subr.bf16.mxu0 0
  %383 = vmatpush1.bf16.msra.mxu0 0
  %384 = vmatprep.subr.bf16.mxu0 0
  %385 = vmatpush1.bf16.msra.mxu0 0
  %386 = vmatprep.subr.bf16.mxu0 0
  %387 = vmatpush1.bf16.msra.mxu0 0
  %388 = vmatprep.subr.bf16.mxu0 0
  %389 = vmatpush1.bf16.msra.mxu0 0
  %390 = vmatprep.subr.bf16.mxu0 0
  %391 = vmatpush1.bf16.msra.mxu0 0
  %392 = vmatprep.subr.bf16.mxu0 0
  %393 = vmatpush1.bf16.msra.mxu0 0
  %394 = vmatprep.subr.bf16.mxu0 0
  %395 = vmatpush1.bf16.msra.mxu0 0
  %396 = vmatprep.subr.bf16.mxu0 0
  %397 = vmatpush1.bf16.msra.mxu0 0
  %398 = vmatprep.mubr.bf16.mxu0 0
  %399 = vmatmul.mubr.bf16.gmra.mrb[0].mxu0 %v343
  %v400 = vpop.f32.mrb[0].mxu0
  %v401 = vadd.f32 %v234, %v400
  %v402 = vpop.f32.mrb[0].mxu0
  %v403 = vpop.f32.mrb[0].mxu0
  %v404 = vadd.f32 %v237, %v403
  %v405 = vpop.f32.mrb[0].mxu0
  %406 = vmatprep.mubr.bf16.mxu0 0
  %407 = vmatmul.mubr.bf16.gmra.mrb[0].mxu0 %v346
  %v408 = vpop.f32.mrb[0].mxu0
  %v409 = vadd.f32 %v242, %v408
  %v410 = vpop.f32.mrb[0].mxu0
  %v411 = vpop.f32.mrb[0].mxu0
  %v412 = vadd.f32 %v245, %v411
  %v413 = vpop.f32.mrb[0].mxu0
  %414 = vmatprep.mubr.bf16.mxu0 0
  %415 = vmatmul.mubr.bf16.gmra.mrb[0].mxu0 %v349
  %v416 = vpop.f32.mrb[0].mxu0
  %v417 = vadd.f32 %v250, %v416
  %v418 = vpop.f32.mrb[0].mxu0
  %v419 = vpop.f32.mrb[0].mxu0
  %v420 = vadd.f32 %v253, %v419
  %v421 = vpop.f32.mrb[0].mxu0
  %422 = vmatprep.mubr.bf16.mxu0 0
  %423 = vmatmul.mubr.bf16.gmra.mrb[0].mxu0 %v352
  %v424 = vpop.f32.mrb[0].mxu0
  %v425 = vadd.f32 %v258, %v424
  %v426 = vpop.f32.mrb[0].mxu0
  %v427 = vpop.f32.mrb[0].mxu0
  %v428 = vadd.f32 %v261, %v427
  %v429 = vpop.f32.mrb[0].mxu0
  %430 = vmatprep.mubr.bf16.mxu0 0
  %431 = vmatmul.mubr.bf16.gmra.mrb[0].mxu0 %v355
  %v432 = vpop.f32.mrb[0].mxu0
  %v433 = vadd.f32 %v266, %v432
  %v434 = vpop.f32.mrb[0].mxu0
  %v435 = vpop.f32.mrb[0].mxu0
  %v436 = vadd.f32 %v269, %v435
  %v437 = vpop.f32.mrb[0].mxu0
  %438 = vmatprep.mubr.bf16.mxu0 0
  %439 = vmatmul.mubr.bf16.gmra.mrb[0].mxu0 %v358
  %v440 = vpop.f32.mrb[0].mxu0
  %v441 = vadd.f32 %v274, %v440
  %v442 = vpop.f32.mrb[0].mxu0
  %v443 = vpop.f32.mrb[0].mxu0
  %v444 = vadd.f32 %v277, %v443
  %v445 = vpop.f32.mrb[0].mxu0
  %446 = vmatprep.mubr.bf16.mxu0 0
  %447 = vmatmul.mubr.bf16.gmra.mrb[0].mxu0 %v361
  %v448 = vpop.f32.mrb[0].mxu0
  %v449 = vadd.f32 %v282, %v448
  %v450 = vpop.f32.mrb[0].mxu0
  %v451 = vpop.f32.mrb[0].mxu0
  %v452 = vadd.f32 %v285, %v451
  %v453 = vpop.f32.mrb[0].mxu0
  %454 = vmatprep.mubr.bf16.mxu0 0
  %455 = vmatmul.mubr.bf16.gmra.mrb[0].mxu0 %v364
  %v456 = vpop.f32.mrb[0].mxu0
  %v457 = vadd.f32 %v290, %v456
  %v458 = vpop.f32.mrb[0].mxu0
  %v459 = vpop.f32.mrb[0].mxu0
  %v460 = vadd.f32 %v293, %v459
  %v461 = vpop.f32.mrb[0].mxu0
  %462 = vdwg.mxu0
  %v463 = vld [vmem:[%s4] sm:$0x1]
  %v465 = vlaneseq
  %v466 = vshrl.u32 %v465, 7
  %v467 = vsub.s32 0, %v466
  %v468 = vrot.slane %v463, %v467
  %v470 = vadd.f32 %v401, %v468
  %v471 = vadd.f32 %v404, %v468
  %v472 = vadd.f32 %v409, %v468
  %v473 = vadd.f32 %v412, %v468
  %v474 = vadd.f32 %v417, %v468
  %v475 = vadd.f32 %v420, %v468
  %v476 = vadd.f32 %v425, %v468
  %v477 = vadd.f32 %v428, %v468
  %v478 = vadd.f32 %v433, %v468
  %v479 = vadd.f32 %v436, %v468
  %v480 = vadd.f32 %v441, %v468
  %v481 = vadd.f32 %v444, %v468
  %v482 = vadd.f32 %v449, %v468
  %v483 = vadd.f32 %v452, %v468
  %v484 = vadd.f32 %v457, %v468
  %v485 = vadd.f32 %v460, %v468
  %v486 = vmax.f32 %v470, 0.0
  %v487 = vmax.f32 %v471, 0.0
  %v488 = vmax.f32 %v472, 0.0
  %v489 = vmax.f32 %v473, 0.0
  %v490 = vmax.f32 %v474, 0.0
  %v491 = vmax.f32 %v475, 0.0
  %v492 = vmax.f32 %v476, 0.0
  %v493 = vmax.f32 %v477, 0.0
  %v494 = vmax.f32 %v478, 0.0
  %v495 = vmax.f32 %v479, 0.0
  %v496 = vmax.f32 %v480, 0.0
  %v497 = vmax.f32 %v481, 0.0
  %v498 = vmax.f32 %v482, 0.0
  %v499 = vmax.f32 %v483, 0.0
  %v500 = vmax.f32 %v484, 0.0
  %v501 = vmax.f32 %v485, 0.0
  %v502 = vld [vmem:[%s5] sm:$0xf]
  %v503 = vld [vmem:[%s5 + $0x4] sm:$0xf]
  %v504 = vld [vmem:[%s5 + $0x8] sm:$0xf]
  %v505 = vld [vmem:[%s5 + $0xc] sm:$0xf]
  %v506 = vunpack.c.l.bf16 %v502
  %v507 = vunpack.c.l.bf16 %v503
  %v508 = vunpack.c.l.bf16 %v504
  %v509 = vunpack.c.l.bf16 %v505
  %v510 = vld [vmem:[%s6] sm:$0x1]
  %v512 = vlaneseq
  %v513 = vshrl.u32 %v512, 7
  %v514 = vsub.s32 0, %v513
  %v515 = vrot.slane %v510, %v514
  %vm517 = vcmask 261120
  %v519 = vsel %vm517, %v486, 0
  %v522 = vsel %vm517, %v487, 0
  %v525 = vsel %vm517, %v488, 0
  %v528 = vsel %vm517, %v489, 0
  %v531 = vsel %vm517, %v490, 0
  %v534 = vsel %vm517, %v491, 0
  %v537 = vsel %vm517, %v492, 0
  %v540 = vsel %vm517, %v493, 0
  %v543 = vsel %vm517, %v494, 0
  %v546 = vsel %vm517, %v495, 0
  %v549 = vsel %vm517, %v496, 0
  %v552 = vsel %vm517, %v497, 0
  %v555 = vsel %vm517, %v498, 0
  %v558 = vsel %vm517, %v499, 0
  %v561 = vsel %vm517, %v500, 0
  %v564 = vsel %vm517, %v501, 0
  %566 = vmatprep.subr.mxu0 0.0
  %567 = vmatpush1.msra.mxu0 %v506
  %568 = vmatprep.subr.mxu0 0.0
  %569 = vmatpush1.msra.mxu0 %v507
  %570 = vmatprep.subr.mxu0 0.0
  %571 = vmatpush1.msra.mxu0 %v508
  %572 = vmatprep.subr.mxu0 0.0
  %573 = vmatpush1.msra.mxu0 %v509
  %574 = vmatprep.subr.mxu0 0.0
  %575 = vmatpush1.msra.mxu0 0.0
  %576 = vmatprep.subr.mxu0 0.0
  %577 = vmatpush1.msra.mxu0 0.0
  %578 = vmatprep.subr.mxu0 0.0
  %579 = vmatpush1.msra.mxu0 0.0
  %580 = vmatprep.subr.mxu0 0.0
  %581 = vmatpush1.msra.mxu0 0.0
  %582 = vmatprep.subr.mxu0 0.0
  %583 = vmatpush1.msra.mxu0 0.0
  %584 = vmatprep.subr.mxu0 0.0
  %585 = vmatpush1.msra.mxu0 0.0
  %586 = vmatprep.subr.mxu0 0.0
  %587 = vmatpush1.msra.mxu0 0.0
  %588 = vmatprep.subr.mxu0 0.0
  %589 = vmatpush1.msra.mxu0 0.0
  %590 = vmatprep.subr.mxu0 0.0
  %591 = vmatpush1.msra.mxu0 0.0
  %592 = vmatprep.subr.mxu0 0.0
  %593 = vmatpush1.msra.mxu0 0.0
  %594 = vmatprep.subr.mxu0 0.0
  %595 = vmatpush1.msra.mxu0 0.0
  %596 = vmatprep.subr.mxu0 0.0
  %597 = vmatpush1.msra.mxu0 0.0
  %598 = vmatprep.subr.mxu0 0.0
  %599 = vmatpush1.msra.mxu0 0.0
  %600 = vmatprep.subr.mxu0 0.0
  %601 = vmatpush1.msra.mxu0 0.0
  %602 = vmatprep.subr.mxu0 0.0
  %603 = vmatpush1.msra.mxu0 0.0
  %604 = vmatprep.subr.mxu0 0.0
  %605 = vmatpush1.msra.mxu0 0.0
  %606 = vmatprep.subr.mxu0 0.0
  %607 = vmatpush1.msra.mxu0 0.0
  %608 = vmatprep.subr.mxu0 0.0
  %609 = vmatpush1.msra.mxu0 0.0
  %610 = vmatprep.subr.mxu0 0.0
  %611 = vmatpush1.msra.mxu0 0.0
  %612 = vmatprep.subr.mxu0 0.0
  %613 = vmatpush1.msra.mxu0 0.0
  %614 = vmatprep.subr.mxu0 0.0
  %615 = vmatpush1.msra.mxu0 0.0
  %616 = vmatprep.subr.mxu0 0.0
  %617 = vmatpush1.msra.mxu0 0.0
  %618 = vmatprep.subr.mxu0 0.0
  %619 = vmatpush1.msra.mxu0 0.0
  %620 = vmatprep.subr.mxu0 0.0
  %621 = vmatpush1.msra.mxu0 0.0
  %622 = vmatprep.subr.mxu0 0.0
  %623 = vmatpush1.msra.mxu0 0.0
  %624 = vmatprep.subr.mxu0 0.0
  %625 = vmatpush1.msra.mxu0 0.0
  %626 = vmatprep.subr.mxu0 0.0
  %627 = vmatpush1.msra.mxu0 0.0
  %628 = vmatprep.subr.mxu0 0.0
  %629 = vmatpush1.msra.mxu0 0.0
  %630 = vmatprep.mubr.f32.mxu0 0.0
  %631 = vmatmul.mubr.f32.gmra.mrb[0].mxu0 %v519
  %v632 = vpop.f32.mrb[0].mxu0
  %v633 = vadd.f32 %v515, %v632
  %v634 = vpop.f32.mrb[0].mxu0
  %635 = vmatprep.mubr.f32.mxu0 0.0
  %636 = vmatmul.mubr.f32.gmra.mrb[0].mxu0 %v522
  %v637 = vpop.f32.mrb[0].mxu0
  %v638 = vadd.f32 %v515, %v637
  %v639 = vpop.f32.mrb[0].mxu0
  %640 = vmatprep.mubr.f32.mxu0 0.0
  %641 = vmatmul.mubr.f32.gmra.mrb[0].mxu0 %v525
  %v642 = vpop.f32.mrb[0].mxu0
  %v643 = vadd.f32 %v515, %v642
  %v644 = vpop.f32.mrb[0].mxu0
  %645 = vmatprep.mubr.f32.mxu0 0.0
  %646 = vmatmul.mubr.f32.gmra.mrb[0].mxu0 %v528
  %v647 = vpop.f32.mrb[0].mxu0
  %v648 = vadd.f32 %v515, %v647
  %v649 = vpop.f32.mrb[0].mxu0
  %650 = vmatprep.mubr.f32.mxu0 0.0
  %651 = vmatmul.mubr.f32.gmra.mrb[0].mxu0 %v531
  %v652 = vpop.f32.mrb[0].mxu0
  %v653 = vadd.f32 %v515, %v652
  %v654 = vpop.f32.mrb[0].mxu0
  %655 = vmatprep.mubr.f32.mxu0 0.0
  %656 = vmatmul.mubr.f32.gmra.mrb[0].mxu0 %v534
  %v657 = vpop.f32.mrb[0].mxu0
  %v658 = vadd.f32 %v515, %v657
  %v659 = vpop.f32.mrb[0].mxu0
  %660 = vmatprep.mubr.f32.mxu0 0.0
  %661 = vmatmul.mubr.f32.gmra.mrb[0].mxu0 %v537
  %v662 = vpop.f32.mrb[0].mxu0
  %v663 = vadd.f32 %v515, %v662
  %v664 = vpop.f32.mrb[0].mxu0
  %665 = vmatprep.mubr.f32.mxu0 0.0
  %666 = vmatmul.mubr.f32.gmra.mrb[0].mxu0 %v540
  %v667 = vpop.f32.mrb[0].mxu0
  %v668 = vadd.f32 %v515, %v667
  %v669 = vpop.f32.mrb[0].mxu0
  %670 = vmatprep.mubr.f32.mxu0 0.0
  %671 = vmatmul.mubr.f32.gmra.mrb[0].mxu0 %v543
  %v672 = vpop.f32.mrb[0].mxu0
  %v673 = vadd.f32 %v515, %v672
  %v674 = vpop.f32.mrb[0].mxu0
  %675 = vmatprep.mubr.f32.mxu0 0.0
  %676 = vmatmul.mubr.f32.gmra.mrb[0].mxu0 %v546
  %v677 = vpop.f32.mrb[0].mxu0
  %v678 = vadd.f32 %v515, %v677
  %v679 = vpop.f32.mrb[0].mxu0
  %680 = vmatprep.mubr.f32.mxu0 0.0
  %681 = vmatmul.mubr.f32.gmra.mrb[0].mxu0 %v549
  %v682 = vpop.f32.mrb[0].mxu0
  %v683 = vadd.f32 %v515, %v682
  %v684 = vpop.f32.mrb[0].mxu0
  %685 = vmatprep.mubr.f32.mxu0 0.0
  %686 = vmatmul.mubr.f32.gmra.mrb[0].mxu0 %v552
  %v687 = vpop.f32.mrb[0].mxu0
  %v688 = vadd.f32 %v515, %v687
  %v689 = vpop.f32.mrb[0].mxu0
  %690 = vmatprep.mubr.f32.mxu0 0.0
  %691 = vmatmul.mubr.f32.gmra.mrb[0].mxu0 %v555
  %v692 = vpop.f32.mrb[0].mxu0
  %v693 = vadd.f32 %v515, %v692
  %v694 = vpop.f32.mrb[0].mxu0
  %695 = vmatprep.mubr.f32.mxu0 0.0
  %696 = vmatmul.mubr.f32.gmra.mrb[0].mxu0 %v558
  %v697 = vpop.f32.mrb[0].mxu0
  %v698 = vadd.f32 %v515, %v697
  %v699 = vpop.f32.mrb[0].mxu0
  %700 = vmatprep.mubr.f32.mxu0 0.0
  %701 = vmatmul.mubr.f32.gmra.mrb[0].mxu0 %v561
  %v702 = vpop.f32.mrb[0].mxu0
  %v703 = vadd.f32 %v515, %v702
  %v704 = vpop.f32.mrb[0].mxu0
  %705 = vmatprep.mubr.f32.mxu0 0.0
  %706 = vmatmul.mubr.f32.gmra.mrb[0].mxu0 %v564
  %v707 = vpop.f32.mrb[0].mxu0
  %v708 = vadd.f32 %v515, %v707
  %v709 = vpop.f32.mrb[0].mxu0
  %710 = vdwg.mxu0
  %v711 = vmax.f32 %v633, 0.0
  %v712 = vmax.f32 %v638, 0.0
  %v713 = vmax.f32 %v643, 0.0
  %v714 = vmax.f32 %v648, 0.0
  %v715 = vmax.f32 %v653, 0.0
  %v716 = vmax.f32 %v658, 0.0
  %v717 = vmax.f32 %v663, 0.0
  %v718 = vmax.f32 %v668, 0.0
  %v719 = vmax.f32 %v673, 0.0
  %v720 = vmax.f32 %v678, 0.0
  %v721 = vmax.f32 %v683, 0.0
  %v722 = vmax.f32 %v688, 0.0
  %v723 = vmax.f32 %v693, 0.0
  %v724 = vmax.f32 %v698, 0.0
  %v725 = vmax.f32 %v703, 0.0
  %v726 = vmax.f32 %v708, 0.0
  %v727 = vld [vmem:[%s7] sm:$0xf]
  %v728 = vld [vmem:[%s7 + $0x4] sm:$0xf]
  %v729 = vunpack.c.l.bf16 %v727
  %v730 = vunpack.c.l.bf16 %v728
  %v731 = vld [vmem:[%s8] sm:$0x1]
  %v733 = vlaneseq
  %v734 = vshrl.u32 %v733, 7
  %v735 = vsub.s32 0, %v734
  %v736 = vrot.slane %v731, %v735
  %v739 = vsel %vm174, %v711, 0
  %v742 = vsel %vm174, %v712, 0
  %v745 = vsel %vm174, %v713, 0
  %v748 = vsel %vm174, %v714, 0
  %v751 = vsel %vm174, %v715, 0
  %v754 = vsel %vm174, %v716, 0
  %v757 = vsel %vm174, %v717, 0
  %v760 = vsel %vm174, %v718, 0
  %v763 = vsel %vm174, %v719, 0
  %v766 = vsel %vm174, %v720, 0
  %v769 = vsel %vm174, %v721, 0
  %v772 = vsel %vm174, %v722, 0
  %v775 = vsel %vm174, %v723, 0
  %v778 = vsel %vm174, %v724, 0
  %v781 = vsel %vm174, %v725, 0
  %v784 = vsel %vm174, %v726, 0
  %786 = vmatprep.subr.mxu0 0.0
  %787 = vmatpush1.msra.mxu0 %v729
  %788 = vmatprep.subr.mxu0 0.0
  %789 = vmatpush1.msra.mxu0 %v730
  %790 = vmatprep.subr.mxu0 0.0
  %791 = vmatpush1.msra.mxu0 0.0
  %792 = vmatprep.subr.mxu0 0.0
  %793 = vmatpush1.msra.mxu0 0.0
  %794 = vmatprep.subr.mxu0 0.0
  %795 = vmatpush1.msra.mxu0 0.0
  %796 = vmatprep.subr.mxu0 0.0
  %797 = vmatpush1.msra.mxu0 0.0
  %798 = vmatprep.subr.mxu0 0.0
  %799 = vmatpush1.msra.mxu0 0.0
  %800 = vmatprep.subr.mxu0 0.0
  %801 = vmatpush1.msra.mxu0 0.0
  %802 = vmatprep.subr.mxu0 0.0
  %803 = vmatpush1.msra.mxu0 0.0
  %804 = vmatprep.subr.mxu0 0.0
  %805 = vmatpush1.msra.mxu0 0.0
  %806 = vmatprep.subr.mxu0 0.0
  %807 = vmatpush1.msra.mxu0 0.0
  %808 = vmatprep.subr.mxu0 0.0
  %809 = vmatpush1.msra.mxu0 0.0
  %810 = vmatprep.subr.mxu0 0.0
  %811 = vmatpush1.msra.mxu0 0.0
  %812 = vmatprep.subr.mxu0 0.0
  %813 = vmatpush1.msra.mxu0 0.0
  %814 = vmatprep.subr.mxu0 0.0
  %815 = vmatpush1.msra.mxu0 0.0
  %816 = vmatprep.subr.mxu0 0.0
  %817 = vmatpush1.msra.mxu0 0.0
  %818 = vmatprep.subr.mxu0 0.0
  %819 = vmatpush1.msra.mxu0 0.0
  %820 = vmatprep.subr.mxu0 0.0
  %821 = vmatpush1.msra.mxu0 0.0
  %822 = vmatprep.subr.mxu0 0.0
  %823 = vmatpush1.msra.mxu0 0.0
  %824 = vmatprep.subr.mxu0 0.0
  %825 = vmatpush1.msra.mxu0 0.0
  %826 = vmatprep.subr.mxu0 0.0
  %827 = vmatpush1.msra.mxu0 0.0
  %828 = vmatprep.subr.mxu0 0.0
  %829 = vmatpush1.msra.mxu0 0.0
  %830 = vmatprep.subr.mxu0 0.0
  %831 = vmatpush1.msra.mxu0 0.0
  %832 = vmatprep.subr.mxu0 0.0
  %833 = vmatpush1.msra.mxu0 0.0
  %834 = vmatprep.subr.mxu0 0.0
  %835 = vmatpush1.msra.mxu0 0.0
  %836 = vmatprep.subr.mxu0 0.0
  %837 = vmatpush1.msra.mxu0 0.0
  %838 = vmatprep.subr.mxu0 0.0
  %839 = vmatpush1.msra.mxu0 0.0
  %840 = vmatprep.subr.mxu0 0.0
  %841 = vmatpush1.msra.mxu0 0.0
  %842 = vmatprep.subr.mxu0 0.0
  %843 = vmatpush1.msra.mxu0 0.0
  %844 = vmatprep.subr.mxu0 0.0
  %845 = vmatpush1.msra.mxu0 0.0
  %846 = vmatprep.subr.mxu0 0.0
  %847 = vmatpush1.msra.mxu0 0.0
  %848 = vmatprep.subr.mxu0 0.0
  %849 = vmatpush1.msra.mxu0 0.0
  %850 = vmatprep.mubr.f32.mxu0 0.0
  %851 = vmatmul.mubr.f32.gmra.mrb[0].mxu0 %v739
  %v852 = vpop.f32.mrb[0].mxu0
  %v853 = vadd.f32 %v736, %v852
  %v854 = vpop.f32.mrb[0].mxu0
  %855 = vmatprep.mubr.f32.mxu0 0.0
  %856 = vmatmul.mubr.f32.gmra.mrb[0].mxu0 %v742
  %v857 = vpop.f32.mrb[0].mxu0
  %v858 = vadd.f32 %v736, %v857
  %v859 = vpop.f32.mrb[0].mxu0
  %860 = vmatprep.mubr.f32.mxu0 0.0
  %861 = vmatmul.mubr.f32.gmra.mrb[0].mxu0 %v745
  %v862 = vpop.f32.mrb[0].mxu0
  %v863 = vadd.f32 %v736, %v862
  %v864 = vpop.f32.mrb[0].mxu0
  %865 = vmatprep.mubr.f32.mxu0 0.0
  %866 = vmatmul.mubr.f32.gmra.mrb[0].mxu0 %v748
  %v867 = vpop.f32.mrb[0].mxu0
  %v868 = vadd.f32 %v736, %v867
  %v869 = vpop.f32.mrb[0].mxu0
  %870 = vmatprep.mubr.f32.mxu0 0.0
  %871 = vmatmul.mubr.f32.gmra.mrb[0].mxu0 %v751
  %v872 = vpop.f32.mrb[0].mxu0
  %v873 = vadd.f32 %v736, %v872
  %v874 = vpop.f32.mrb[0].mxu0
  %875 = vmatprep.mubr.f32.mxu0 0.0
  %876 = vmatmul.mubr.f32.gmra.mrb[0].mxu0 %v754
  %v877 = vpop.f32.mrb[0].mxu0
  %v878 = vadd.f32 %v736, %v877
  %v879 = vpop.f32.mrb[0].mxu0
  %880 = vmatprep.mubr.f32.mxu0 0.0
  %881 = vmatmul.mubr.f32.gmra.mrb[0].mxu0 %v757
  %v882 = vpop.f32.mrb[0].mxu0
  %v883 = vadd.f32 %v736, %v882
  %v884 = vpop.f32.mrb[0].mxu0
  %885 = vmatprep.mubr.f32.mxu0 0.0
  %886 = vmatmul.mubr.f32.gmra.mrb[0].mxu0 %v760
  %v887 = vpop.f32.mrb[0].mxu0
  %v888 = vadd.f32 %v736, %v887
  %v889 = vpop.f32.mrb[0].mxu0
  %890 = vmatprep.mubr.f32.mxu0 0.0
  %891 = vmatmul.mubr.f32.gmra.mrb[0].mxu0 %v763
  %v892 = vpop.f32.mrb[0].mxu0
  %v893 = vadd.f32 %v736, %v892
  %v894 = vpop.f32.mrb[0].mxu0
  %895 = vmatprep.mubr.f32.mxu0 0.0
  %896 = vmatmul.mubr.f32.gmra.mrb[0].mxu0 %v766
  %v897 = vpop.f32.mrb[0].mxu0
  %v898 = vadd.f32 %v736, %v897
  %v899 = vpop.f32.mrb[0].mxu0
  %900 = vmatprep.mubr.f32.mxu0 0.0
  %901 = vmatmul.mubr.f32.gmra.mrb[0].mxu0 %v769
  %v902 = vpop.f32.mrb[0].mxu0
  %v903 = vadd.f32 %v736, %v902
  %v904 = vpop.f32.mrb[0].mxu0
  %905 = vmatprep.mubr.f32.mxu0 0.0
  %906 = vmatmul.mubr.f32.gmra.mrb[0].mxu0 %v772
  %v907 = vpop.f32.mrb[0].mxu0
  %v908 = vadd.f32 %v736, %v907
  %v909 = vpop.f32.mrb[0].mxu0
  %910 = vmatprep.mubr.f32.mxu0 0.0
  %911 = vmatmul.mubr.f32.gmra.mrb[0].mxu0 %v775
  %v912 = vpop.f32.mrb[0].mxu0
  %v913 = vadd.f32 %v736, %v912
  %v914 = vpop.f32.mrb[0].mxu0
  %915 = vmatprep.mubr.f32.mxu0 0.0
  %916 = vmatmul.mubr.f32.gmra.mrb[0].mxu0 %v778
  %v917 = vpop.f32.mrb[0].mxu0
  %v918 = vadd.f32 %v736, %v917
  %v919 = vpop.f32.mrb[0].mxu0
  %920 = vmatprep.mubr.f32.mxu0 0.0
  %921 = vmatmul.mubr.f32.gmra.mrb[0].mxu0 %v781
  %v922 = vpop.f32.mrb[0].mxu0
  %v923 = vadd.f32 %v736, %v922
  %v924 = vpop.f32.mrb[0].mxu0
  %925 = vmatprep.mubr.f32.mxu0 0.0
  %926 = vmatmul.mubr.f32.gmra.mrb[0].mxu0 %v784
  %v927 = vpop.f32.mrb[0].mxu0
  %v928 = vadd.f32 %v736, %v927
  %v929 = vpop.f32.mrb[0].mxu0
  %930 = vdwg.mxu0
  %v931 = vmax.f32 %v853, 0.0
  %v932 = vmax.f32 %v858, 0.0
  %v933 = vmax.f32 %v863, 0.0
  %v934 = vmax.f32 %v868, 0.0
  %v935 = vmax.f32 %v873, 0.0
  %v936 = vmax.f32 %v878, 0.0
  %v937 = vmax.f32 %v883, 0.0
  %v938 = vmax.f32 %v888, 0.0
  %v939 = vmax.f32 %v893, 0.0
  %v940 = vmax.f32 %v898, 0.0
  %v941 = vmax.f32 %v903, 0.0
  %v942 = vmax.f32 %v908, 0.0
  %v943 = vmax.f32 %v913, 0.0
  %v944 = vmax.f32 %v918, 0.0
  %v945 = vmax.f32 %v923, 0.0
  %v946 = vmax.f32 %v928, 0.0
  %v947 = vld [vmem:[%s9] sm:$0xf]
  %v948 = vunpack.c.l.bf16 %v947
  %v949 = vld [vmem:[%s10] sm:$0xf]
  %v950 = vld [vmem:[%s10 + $0x4] sm:$0xf]
  %v951 = vunpack.c.l.bf16 %v949
  %v952 = vunpack.c.l.bf16 %v950
  %969 = vrot.lane.b32.xlu0 %v108, 112
  %v970 = vpop.permute.xlu0 %969
  %971 = vrot.lane.b32.xlu0 %v109, 112
  %v972 = vpop.permute.xlu0 %971
  %973 = vrot.lane.b32.xlu0 %v110, 112
  %v974 = vpop.permute.xlu0 %973
  %975 = vrot.lane.b32.xlu0 %v111, 112
  %v976 = vpop.permute.xlu0 %975
  %977 = vrot.lane.b32.xlu0 %v112, 112
  %v978 = vpop.permute.xlu0 %977
  %979 = vrot.lane.b32.xlu0 %v113, 112
  %v980 = vpop.permute.xlu0 %979
  %981 = vrot.lane.b32.xlu0 %v114, 112
  %v982 = vpop.permute.xlu0 %981
  %983 = vrot.lane.b32.xlu0 %v115, 112
  %v984 = vpop.permute.xlu0 %983
  %985 = vrot.lane.b32.xlu0 %v116, 112
  %v986 = vpop.permute.xlu0 %985
  %987 = vrot.lane.b32.xlu0 %v117, 112
  %v988 = vpop.permute.xlu0 %987
  %989 = vrot.lane.b32.xlu0 %v118, 112
  %v990 = vpop.permute.xlu0 %989
  %991 = vrot.lane.b32.xlu0 %v119, 112
  %v992 = vpop.permute.xlu0 %991
  %993 = vrot.lane.b32.xlu0 %v120, 112
  %v994 = vpop.permute.xlu0 %993
  %995 = vrot.lane.b32.xlu0 %v121, 112
  %v996 = vpop.permute.xlu0 %995
  %997 = vrot.lane.b32.xlu0 %v122, 112
  %v998 = vpop.permute.xlu0 %997
  %999 = vrot.lane.b32.xlu0 %v123, 112
  %v1000 = vpop.permute.xlu0 %999
  %v1001 = vsel %vm174, %v970, 0
  %v1003 = vsel %vm174, %v972, 0
  %v1005 = vsel %vm174, %v974, 0
  %v1007 = vsel %vm174, %v976, 0
  %v1009 = vsel %vm174, %v978, 0
  %v1011 = vsel %vm174, %v980, 0
  %v1013 = vsel %vm174, %v982, 0
  %v1015 = vsel %vm174, %v984, 0
  %v1017 = vsel %vm174, %v986, 0
  %v1019 = vsel %vm174, %v988, 0
  %v1021 = vsel %vm174, %v990, 0
  %v1023 = vsel %vm174, %v992, 0
  %v1025 = vsel %vm174, %v994, 0
  %v1027 = vsel %vm174, %v996, 0
  %v1029 = vsel %vm174, %v998, 0
  %v1031 = vsel %vm174, %v1000, 0
  %1033 = vmatprep.subr.mxu0 0.0
  %1034 = vmatpush1.msra.mxu0 %v951
  %1035 = vmatprep.subr.mxu0 0.0
  %1036 = vmatpush1.msra.mxu0 %v952
  %1037 = vmatprep.subr.mxu0 0.0
  %1038 = vmatpush1.msra.mxu0 0.0
  %1039 = vmatprep.subr.mxu0 0.0
  %1040 = vmatpush1.msra.mxu0 0.0
  %1041 = vmatprep.subr.mxu0 0.0
  %1042 = vmatpush1.msra.mxu0 0.0
  %1043 = vmatprep.subr.mxu0 0.0
  %1044 = vmatpush1.msra.mxu0 0.0
  %1045 = vmatprep.subr.mxu0 0.0
  %1046 = vmatpush1.msra.mxu0 0.0
  %1047 = vmatprep.subr.mxu0 0.0
  %1048 = vmatpush1.msra.mxu0 0.0
  %1049 = vmatprep.subr.mxu0 0.0
  %1050 = vmatpush1.msra.mxu0 0.0
  %1051 = vmatprep.subr.mxu0 0.0
  %1052 = vmatpush1.msra.mxu0 0.0
  %1053 = vmatprep.subr.mxu0 0.0
  %1054 = vmatpush1.msra.mxu0 0.0
  %1055 = vmatprep.subr.mxu0 0.0
  %1056 = vmatpush1.msra.mxu0 0.0
  %1057 = vmatprep.subr.mxu0 0.0
  %1058 = vmatpush1.msra.mxu0 0.0
  %1059 = vmatprep.subr.mxu0 0.0
  %1060 = vmatpush1.msra.mxu0 0.0
  %1061 = vmatprep.subr.mxu0 0.0
  %1062 = vmatpush1.msra.mxu0 0.0
  %1063 = vmatprep.subr.mxu0 0.0
  %1064 = vmatpush1.msra.mxu0 0.0
  %1065 = vmatprep.subr.mxu0 0.0
  %1066 = vmatpush1.msra.mxu0 0.0
  %1067 = vmatprep.subr.mxu0 0.0
  %1068 = vmatpush1.msra.mxu0 0.0
  %1069 = vmatprep.subr.mxu0 0.0
  %1070 = vmatpush1.msra.mxu0 0.0
  %1071 = vmatprep.subr.mxu0 0.0
  %1072 = vmatpush1.msra.mxu0 0.0
  %1073 = vmatprep.subr.mxu0 0.0
  %1074 = vmatpush1.msra.mxu0 0.0
  %1075 = vmatprep.subr.mxu0 0.0
  %1076 = vmatpush1.msra.mxu0 0.0
  %1077 = vmatprep.subr.mxu0 0.0
  %1078 = vmatpush1.msra.mxu0 0.0
  %1079 = vmatprep.subr.mxu0 0.0
  %1080 = vmatpush1.msra.mxu0 0.0
  %1081 = vmatprep.subr.mxu0 0.0
  %1082 = vmatpush1.msra.mxu0 0.0
  %1083 = vmatprep.subr.mxu0 0.0
  %1084 = vmatpush1.msra.mxu0 0.0
  %1085 = vmatprep.subr.mxu0 0.0
  %1086 = vmatpush1.msra.mxu0 0.0
  %1087 = vmatprep.subr.mxu0 0.0
  %1088 = vmatpush1.msra.mxu0 0.0
  %1089 = vmatprep.subr.mxu0 0.0
  %1090 = vmatpush1.msra.mxu0 0.0
  %1091 = vmatprep.subr.mxu0 0.0
  %1092 = vmatpush1.msra.mxu0 0.0
  %1093 = vmatprep.subr.mxu0 0.0
  %1094 = vmatpush1.msra.mxu0 0.0
  %1095 = vmatprep.subr.mxu0 0.0
  %1096 = vmatpush1.msra.mxu0 0.0
  %1097 = vmatprep.mubr.f32.mxu0 0.0
  %1098 = vmatmul.mubr.f32.gmra.mrb[0].mxu0 %v1001
  %v1099 = vpop.f32.mrb[0].mxu0
  %v1100 = vadd.f32 0.0, %v1099
  %v1101 = vpop.f32.mrb[0].mxu0
  %1102 = vmatprep.mubr.f32.mxu0 0.0
  %1103 = vmatmul.mubr.f32.gmra.mrb[0].mxu0 %v1003
  %v1104 = vpop.f32.mrb[0].mxu0
  %v1105 = vadd.f32 0.0, %v1104
  %v1106 = vpop.f32.mrb[0].mxu0
  %1107 = vmatprep.mubr.f32.mxu0 0.0
  %1108 = vmatmul.mubr.f32.gmra.mrb[0].mxu0 %v1005
  %v1109 = vpop.f32.mrb[0].mxu0
  %v1110 = vadd.f32 0.0, %v1109
  %v1111 = vpop.f32.mrb[0].mxu0
  %1112 = vmatprep.mubr.f32.mxu0 0.0
  %1113 = vmatmul.mubr.f32.gmra.mrb[0].mxu0 %v1007
  %v1114 = vpop.f32.mrb[0].mxu0
  %v1115 = vadd.f32 0.0, %v1114
  %v1116 = vpop.f32.mrb[0].mxu0
  %1117 = vmatprep.mubr.f32.mxu0 0.0
  %1118 = vmatmul.mubr.f32.gmra.mrb[0].mxu0 %v1009
  %v1119 = vpop.f32.mrb[0].mxu0
  %v1120 = vadd.f32 0.0, %v1119
  %v1121 = vpop.f32.mrb[0].mxu0
  %1122 = vmatprep.mubr.f32.mxu0 0.0
  %1123 = vmatmul.mubr.f32.gmra.mrb[0].mxu0 %v1011
  %v1124 = vpop.f32.mrb[0].mxu0
  %v1125 = vadd.f32 0.0, %v1124
  %v1126 = vpop.f32.mrb[0].mxu0
  %1127 = vmatprep.mubr.f32.mxu0 0.0
  %1128 = vmatmul.mubr.f32.gmra.mrb[0].mxu0 %v1013
  %v1129 = vpop.f32.mrb[0].mxu0
  %v1130 = vadd.f32 0.0, %v1129
  %v1131 = vpop.f32.mrb[0].mxu0
  %1132 = vmatprep.mubr.f32.mxu0 0.0
  %1133 = vmatmul.mubr.f32.gmra.mrb[0].mxu0 %v1015
  %v1134 = vpop.f32.mrb[0].mxu0
  %v1135 = vadd.f32 0.0, %v1134
  %v1136 = vpop.f32.mrb[0].mxu0
  %1137 = vmatprep.mubr.f32.mxu0 0.0
  %1138 = vmatmul.mubr.f32.gmra.mrb[0].mxu0 %v1017
  %v1139 = vpop.f32.mrb[0].mxu0
  %v1140 = vadd.f32 0.0, %v1139
  %v1141 = vpop.f32.mrb[0].mxu0
  %1142 = vmatprep.mubr.f32.mxu0 0.0
  %1143 = vmatmul.mubr.f32.gmra.mrb[0].mxu0 %v1019
  %v1144 = vpop.f32.mrb[0].mxu0
  %v1145 = vadd.f32 0.0, %v1144
  %v1146 = vpop.f32.mrb[0].mxu0
  %1147 = vmatprep.mubr.f32.mxu0 0.0
  %1148 = vmatmul.mubr.f32.gmra.mrb[0].mxu0 %v1021
  %v1149 = vpop.f32.mrb[0].mxu0
  %v1150 = vadd.f32 0.0, %v1149
  %v1151 = vpop.f32.mrb[0].mxu0
  %1152 = vmatprep.mubr.f32.mxu0 0.0
  %1153 = vmatmul.mubr.f32.gmra.mrb[0].mxu0 %v1023
  %v1154 = vpop.f32.mrb[0].mxu0
  %v1155 = vadd.f32 0.0, %v1154
  %v1156 = vpop.f32.mrb[0].mxu0
  %1157 = vmatprep.mubr.f32.mxu0 0.0
  %1158 = vmatmul.mubr.f32.gmra.mrb[0].mxu0 %v1025
  %v1159 = vpop.f32.mrb[0].mxu0
  %v1160 = vadd.f32 0.0, %v1159
  %v1161 = vpop.f32.mrb[0].mxu0
  %1162 = vmatprep.mubr.f32.mxu0 0.0
  %1163 = vmatmul.mubr.f32.gmra.mrb[0].mxu0 %v1027
  %v1164 = vpop.f32.mrb[0].mxu0
  %v1165 = vadd.f32 0.0, %v1164
  %v1166 = vpop.f32.mrb[0].mxu0
  %1167 = vmatprep.mubr.f32.mxu0 0.0
  %1168 = vmatmul.mubr.f32.gmra.mrb[0].mxu0 %v1029
  %v1169 = vpop.f32.mrb[0].mxu0
  %v1170 = vadd.f32 0.0, %v1169
  %v1171 = vpop.f32.mrb[0].mxu0
  %1172 = vmatprep.mubr.f32.mxu0 0.0
  %1173 = vmatmul.mubr.f32.gmra.mrb[0].mxu0 %v1031
  %v1174 = vpop.f32.mrb[0].mxu0
  %v1175 = vadd.f32 0.0, %v1174
  %v1176 = vpop.f32.mrb[0].mxu0
  %1177 = vdwg.mxu0
  %vm1178 = vcmask 64512
  %v1180 = vsel %vm1178, %v931, 0
  %v1183 = vsel %vm1178, %v932, 0
  %v1186 = vsel %vm1178, %v933, 0
  %v1189 = vsel %vm1178, %v934, 0
  %v1192 = vsel %vm1178, %v935, 0
  %v1195 = vsel %vm1178, %v936, 0
  %v1198 = vsel %vm1178, %v937, 0
  %v1201 = vsel %vm1178, %v938, 0
  %v1204 = vsel %vm1178, %v939, 0
  %v1207 = vsel %vm1178, %v940, 0
  %v1210 = vsel %vm1178, %v941, 0
  %v1213 = vsel %vm1178, %v942, 0
  %v1216 = vsel %vm1178, %v943, 0
  %v1219 = vsel %vm1178, %v944, 0
  %v1222 = vsel %vm1178, %v945, 0
  %v1225 = vsel %vm1178, %v946, 0
  %1227 = vmatprep.subr.mxu0 0.0
  %1228 = vmatpush1.msra.mxu0 %v948
  %1229 = vmatprep.subr.mxu0 0.0
  %1230 = vmatpush1.msra.mxu0 0.0
  %1231 = vmatprep.subr.mxu0 0.0
  %1232 = vmatpush1.msra.mxu0 0.0
  %1233 = vmatprep.subr.mxu0 0.0
  %1234 = vmatpush1.msra.mxu0 0.0
  %1235 = vmatprep.subr.mxu0 0.0
  %1236 = vmatpush1.msra.mxu0 0.0
  %1237 = vmatprep.subr.mxu0 0.0
  %1238 = vmatpush1.msra.mxu0 0.0
  %1239 = vmatprep.subr.mxu0 0.0
  %1240 = vmatpush1.msra.mxu0 0.0
  %1241 = vmatprep.subr.mxu0 0.0
  %1242 = vmatpush1.msra.mxu0 0.0
  %1243 = vmatprep.subr.mxu0 0.0
  %1244 = vmatpush1.msra.mxu0 0.0
  %1245 = vmatprep.subr.mxu0 0.0
  %1246 = vmatpush1.msra.mxu0 0.0
  %1247 = vmatprep.subr.mxu0 0.0
  %1248 = vmatpush1.msra.mxu0 0.0
  %1249 = vmatprep.subr.mxu0 0.0
  %1250 = vmatpush1.msra.mxu0 0.0
  %1251 = vmatprep.subr.mxu0 0.0
  %1252 = vmatpush1.msra.mxu0 0.0
  %1253 = vmatprep.subr.mxu0 0.0
  %1254 = vmatpush1.msra.mxu0 0.0
  %1255 = vmatprep.subr.mxu0 0.0
  %1256 = vmatpush1.msra.mxu0 0.0
  %1257 = vmatprep.subr.mxu0 0.0
  %1258 = vmatpush1.msra.mxu0 0.0
  %1259 = vmatprep.subr.mxu0 0.0
  %1260 = vmatpush1.msra.mxu0 0.0
  %1261 = vmatprep.subr.mxu0 0.0
  %1262 = vmatpush1.msra.mxu0 0.0
  %1263 = vmatprep.subr.mxu0 0.0
  %1264 = vmatpush1.msra.mxu0 0.0
  %1265 = vmatprep.subr.mxu0 0.0
  %1266 = vmatpush1.msra.mxu0 0.0
  %1267 = vmatprep.subr.mxu0 0.0
  %1268 = vmatpush1.msra.mxu0 0.0
  %1269 = vmatprep.subr.mxu0 0.0
  %1270 = vmatpush1.msra.mxu0 0.0
  %1271 = vmatprep.subr.mxu0 0.0
  %1272 = vmatpush1.msra.mxu0 0.0
  %1273 = vmatprep.subr.mxu0 0.0
  %1274 = vmatpush1.msra.mxu0 0.0
  %1275 = vmatprep.subr.mxu0 0.0
  %1276 = vmatpush1.msra.mxu0 0.0
  %1277 = vmatprep.subr.mxu0 0.0
  %1278 = vmatpush1.msra.mxu0 0.0
  %1279 = vmatprep.subr.mxu0 0.0
  %1280 = vmatpush1.msra.mxu0 0.0
  %1281 = vmatprep.subr.mxu0 0.0
  %1282 = vmatpush1.msra.mxu0 0.0
  %1283 = vmatprep.subr.mxu0 0.0
  %1284 = vmatpush1.msra.mxu0 0.0
  %1285 = vmatprep.subr.mxu0 0.0
  %1286 = vmatpush1.msra.mxu0 0.0
  %1287 = vmatprep.subr.mxu0 0.0
  %1288 = vmatpush1.msra.mxu0 0.0
  %1289 = vmatprep.subr.mxu0 0.0
  %1290 = vmatpush1.msra.mxu0 0.0
  %1291 = vmatprep.mubr.f32.mxu0 0.0
  %1292 = vmatmul.mubr.f32.gmra.mrb[0].mxu0 %v1180
  %v1293 = vpop.f32.mrb[0].mxu0
  %v1294 = vadd.f32 %v1100, %v1293
  %v1295 = vpop.f32.mrb[0].mxu0
  %1296 = vmatprep.mubr.f32.mxu0 0.0
  %1297 = vmatmul.mubr.f32.gmra.mrb[0].mxu0 %v1183
  %v1298 = vpop.f32.mrb[0].mxu0
  %v1299 = vadd.f32 %v1105, %v1298
  %v1300 = vpop.f32.mrb[0].mxu0
  %1301 = vmatprep.mubr.f32.mxu0 0.0
  %1302 = vmatmul.mubr.f32.gmra.mrb[0].mxu0 %v1186
  %v1303 = vpop.f32.mrb[0].mxu0
  %v1304 = vadd.f32 %v1110, %v1303
  %v1305 = vpop.f32.mrb[0].mxu0
  %1306 = vmatprep.mubr.f32.mxu0 0.0
  %1307 = vmatmul.mubr.f32.gmra.mrb[0].mxu0 %v1189
  %v1308 = vpop.f32.mrb[0].mxu0
  %v1309 = vadd.f32 %v1115, %v1308
  %v1310 = vpop.f32.mrb[0].mxu0
  %1311 = vmatprep.mubr.f32.mxu0 0.0
  %1312 = vmatmul.mubr.f32.gmra.mrb[0].mxu0 %v1192
  %v1313 = vpop.f32.mrb[0].mxu0
  %v1314 = vadd.f32 %v1120, %v1313
  %v1315 = vpop.f32.mrb[0].mxu0
  %1316 = vmatprep.mubr.f32.mxu0 0.0
  %1317 = vmatmul.mubr.f32.gmra.mrb[0].mxu0 %v1195
  %v1318 = vpop.f32.mrb[0].mxu0
  %v1319 = vadd.f32 %v1125, %v1318
  %v1320 = vpop.f32.mrb[0].mxu0
  %1321 = vmatprep.mubr.f32.mxu0 0.0
  %1322 = vmatmul.mubr.f32.gmra.mrb[0].mxu0 %v1198
  %v1323 = vpop.f32.mrb[0].mxu0
  %v1324 = vadd.f32 %v1130, %v1323
  %v1325 = vpop.f32.mrb[0].mxu0
  %1326 = vmatprep.mubr.f32.mxu0 0.0
  %1327 = vmatmul.mubr.f32.gmra.mrb[0].mxu0 %v1201
  %v1328 = vpop.f32.mrb[0].mxu0
  %v1329 = vadd.f32 %v1135, %v1328
  %v1330 = vpop.f32.mrb[0].mxu0
  %1331 = vmatprep.mubr.f32.mxu0 0.0
  %1332 = vmatmul.mubr.f32.gmra.mrb[0].mxu0 %v1204
  %v1333 = vpop.f32.mrb[0].mxu0
  %v1334 = vadd.f32 %v1140, %v1333
  %v1335 = vpop.f32.mrb[0].mxu0
  %1336 = vmatprep.mubr.f32.mxu0 0.0
  %1337 = vmatmul.mubr.f32.gmra.mrb[0].mxu0 %v1207
  %v1338 = vpop.f32.mrb[0].mxu0
  %v1339 = vadd.f32 %v1145, %v1338
  %v1340 = vpop.f32.mrb[0].mxu0
  %1341 = vmatprep.mubr.f32.mxu0 0.0
  %1342 = vmatmul.mubr.f32.gmra.mrb[0].mxu0 %v1210
  %v1343 = vpop.f32.mrb[0].mxu0
  %v1344 = vadd.f32 %v1150, %v1343
  %v1345 = vpop.f32.mrb[0].mxu0
  %1346 = vmatprep.mubr.f32.mxu0 0.0
  %1347 = vmatmul.mubr.f32.gmra.mrb[0].mxu0 %v1213
  %v1348 = vpop.f32.mrb[0].mxu0
  %v1349 = vadd.f32 %v1155, %v1348
  %v1350 = vpop.f32.mrb[0].mxu0
  %1351 = vmatprep.mubr.f32.mxu0 0.0
  %1352 = vmatmul.mubr.f32.gmra.mrb[0].mxu0 %v1216
  %v1353 = vpop.f32.mrb[0].mxu0
  %v1354 = vadd.f32 %v1160, %v1353
  %v1355 = vpop.f32.mrb[0].mxu0
  %1356 = vmatprep.mubr.f32.mxu0 0.0
  %1357 = vmatmul.mubr.f32.gmra.mrb[0].mxu0 %v1219
  %v1358 = vpop.f32.mrb[0].mxu0
  %v1359 = vadd.f32 %v1165, %v1358
  %v1360 = vpop.f32.mrb[0].mxu0
  %1361 = vmatprep.mubr.f32.mxu0 0.0
  %1362 = vmatmul.mubr.f32.gmra.mrb[0].mxu0 %v1222
  %v1363 = vpop.f32.mrb[0].mxu0
  %v1364 = vadd.f32 %v1170, %v1363
  %v1365 = vpop.f32.mrb[0].mxu0
  %1366 = vmatprep.mubr.f32.mxu0 0.0
  %1367 = vmatmul.mubr.f32.gmra.mrb[0].mxu0 %v1225
  %v1368 = vpop.f32.mrb[0].mxu0
  %v1369 = vadd.f32 %v1175, %v1368
  %v1370 = vpop.f32.mrb[0].mxu0
  %1371 = vdwg.mxu0
  %v1372 = vld [vmem:[#allocation2] sm:$0x1]
  %v1374 = vlaneseq
  %v1375 = vshrl.u32 %v1374, 7
  %v1376 = vsub.s32 0, %v1375
  %v1377 = vrot.slane %v1372, %v1376
  %v1379 = vadd.f32 %v1294, %v1377
  %v1380 = vadd.f32 %v1299, %v1377
  %v1381 = vadd.f32 %v1304, %v1377
  %v1382 = vadd.f32 %v1309, %v1377
  %v1383 = vadd.f32 %v1314, %v1377
  %v1384 = vadd.f32 %v1319, %v1377
  %v1385 = vadd.f32 %v1324, %v1377
  %v1386 = vadd.f32 %v1329, %v1377
  %v1387 = vadd.f32 %v1334, %v1377
  %v1388 = vadd.f32 %v1339, %v1377
  %v1389 = vadd.f32 %v1344, %v1377
  %v1390 = vadd.f32 %v1349, %v1377
  %v1391 = vadd.f32 %v1354, %v1377
  %v1392 = vadd.f32 %v1359, %v1377
  %v1393 = vadd.f32 %v1364, %v1377
  %v1394 = vadd.f32 %v1369, %v1377
  %vm1395 = vcmask 7168
  %1396 = vst.msk [vmem:[%s12] sm:$0xff] %vm1395, %v1379
  %1397 = vst.msk [vmem:[%s12 + $0x8] sm:$0xff] %vm1395, %v1380
  %1398 = vst.msk [vmem:[%s12 + $0x10] sm:$0xff] %vm1395, %v1381
  %1399 = vst.msk [vmem:[%s12 + $0x18] sm:$0xff] %vm1395, %v1382
  %1400 = vst.msk [vmem:[%s12 + $0x20] sm:$0xff] %vm1395, %v1383
  %1401 = vst.msk [vmem:[%s12 + $0x28] sm:$0xff] %vm1395, %v1384
  %1402 = vst.msk [vmem:[%s12 + $0x30] sm:$0xff] %vm1395, %v1385
  %1403 = vst.msk [vmem:[%s12 + $0x38] sm:$0xff] %vm1395, %v1386
  %1404 = vst.msk [vmem:[%s12 + $0x40] sm:$0xff] %vm1395, %v1387
  %1405 = vst.msk [vmem:[%s12 + $0x48] sm:$0xff] %vm1395, %v1388
  %1406 = vst.msk [vmem:[%s12 + $0x50] sm:$0xff] %vm1395, %v1389
  %1407 = vst.msk [vmem:[%s12 + $0x58] sm:$0xff] %vm1395, %v1390
  %1408 = vst.msk [vmem:[%s12 + $0x60] sm:$0xff] %vm1395, %v1391
  %1409 = vst.msk [vmem:[%s12 + $0x68] sm:$0xff] %vm1395, %v1392
  %1410 = vst.msk [vmem:[%s12 + $0x70] sm:$0xff] %vm1395, %v1393
  %1411 = vst.msk [vmem:[%s12 + $0x78] sm:$0xff] %vm1395, %v1394
  // Predicated region
  $region50: #{tpu_custom_call.1} parent=0 // pred_check
    _
  $region51: #{tpu_custom_call.1} parent=0 // pred_check_branch
    %1413 = sbr.rel (0) target = $region53
  $region52: #{tpu_custom_call.1} parent=0 // pred_region
    _
  $region53: #{tpu_custom_call.1} parent=0 // pred_fallthru
    _
  // Predicated region
  $region54: #{tpu_custom_call.1} parent=0 // pred_check
    _
  $region55: #{tpu_custom_call.1} parent=0 // pred_check_branch
    %1415 = sbr.rel (0) target = $region57
  $region56: #{tpu_custom_call.1} parent=0 // pred_region
    _
  $region57: #{tpu_custom_call.1} parent=0 // pred_fallthru
    _

</llo_original>
